<compile_context>
chip_gen: v5e
topology: v5e:2x2
jax: 0.10.0
libtpu: 0.0.40
codegen_flags: <defaults>
</compile_context>

<pallas_src>
import functools

import jax
import jax.numpy as jnp
import numpy as np
from jax.experimental import pallas as pl
from jax.experimental.pallas import tpu as pltpu

INPUT_SIZE = 11
HIDDEN = 64
HIDDEN_P = 128          # hidden padded to one full lane group
OUTPUT_SIZE = 1
SEQ_LEN = 8
BATCH = 1


def _lstm_head_kernel(x_ref, wih_ref, whh_ref, b_ref, whead_ref, bhead_ref,
                      h0_ref, c0_ref,
                      pred_ref, h_out_ref, c_out_ref,
                      *, seq, batch, hidden_p):
    hp = hidden_p

    # Input projection for all timesteps in one MXU matmul: (S*B, I) @ (I, 4*Hp)
    gx = (
        jnp.dot(x_ref[...], wih_ref[...], preferred_element_type=jnp.float32)
        + b_ref[...]
    )  # (seq*batch, 4*Hp), lives in vregs

    whh = whh_ref[...]          # (Hp, 4*Hp), hoisted out of the loop
    h = h0_ref[...]             # (batch, Hp)
    c = c0_ref[...]             # (batch, Hp)

    hs = []
    # Static unroll: seq is a compile-time constant, state stays in vregs.
    for t in range(seq):
        g = gx[t * batch:(t + 1) * batch, :] + jnp.dot(
            h, whh, preferred_element_type=jnp.float32
        )
        # PyTorch gate order: i, f, g, o — each slice is a whole lane group.
        i_g = jax.nn.sigmoid(g[:, 0:hp])
        f_g = jax.nn.sigmoid(g[:, hp:2 * hp])
        g_g = jnp.tanh(g[:, 2 * hp:3 * hp])
        o_g = jax.nn.sigmoid(g[:, 3 * hp:4 * hp])
        c = f_g * c + i_g * g_g
        h = o_g * jnp.tanh(c)
        hs.append(h)

    # Final states written once, after the recurrence.
    h_out_ref[...] = h
    c_out_ref[...] = c

    # Linear head as VPU multiply + lane reduction (skips an N=1 MXU matmul).
    hs_all = jnp.concatenate(hs, axis=0)                  # (seq*batch, Hp)
    pred_ref[...] = (
        jnp.sum(hs_all * whead_ref[...], axis=-1, keepdims=True) + bhead_ref[...]
    )


def prepare_params(params, *, hidden=HIDDEN, hidden_p=HIDDEN_P):
    """One-time param prep: transpose, cast, sum biases, pad hidden -> hidden_p.

    PyTorch packs gates [i|f|g|o] in blocks of `hidden`; we re-pack each gate
    into its own `hidden_p`-lane group (zero padded) so gate slices inside the
    kernel are whole 128-lane groups.
    """
    w_ih = np.asarray(params["w_ih"], np.float32)     # (4H, I)
    w_hh = np.asarray(params["w_hh"], np.float32)     # (4H, H)
    b = np.asarray(params["b_ih"], np.float32) + np.asarray(params["b_hh"], np.float32)
    w_head = np.asarray(params["w_head"], np.float32)  # (1, H)
    b_head = np.asarray(params["b_head"], np.float32)  # (1,)

    in_size = w_ih.shape[1]

    def pad_gates_t(w):  # (4H, K) -> (K, 4*Hp), gate k in cols [k*Hp, k*Hp+H)
        K = w.shape[1]
        out = np.zeros((K, 4 * hidden_p), np.float32)
        for k in range(4):
            out[:, k * hidden_p:k * hidden_p + hidden] = w[k * hidden:(k + 1) * hidden, :].T
        return out

    wih_t = pad_gates_t(w_ih)                              # (I, 4*Hp)
    whh_t = np.zeros((hidden_p, 4 * hidden_p), np.float32)
    whh_t[:hidden, :] = pad_gates_t(w_hh)                  # (Hp, 4*Hp)

    b_p = np.zeros((1, 4 * hidden_p), np.float32)
    for k in range(4):
        b_p[0, k * hidden_p:k * hidden_p + hidden] = b[k * hidden:(k + 1) * hidden]

    whead_row = np.zeros((1, hidden_p), np.float32)
    whead_row[0, :hidden] = w_head[0, :]
    bhead = b_head.reshape(1, 1)

    return {
        "wih_t": jnp.asarray(wih_t),
        "whh_t": jnp.asarray(whh_t),
        "bias": jnp.asarray(b_p),
        "whead_row": jnp.asarray(whead_row),
        "bhead": jnp.asarray(bhead),
        "in_size": in_size,
        "hidden": hidden,
        "hidden_p": hidden_p,
    }


def bmi_lstm_forward(prepared, input_layer, h_t, c_t, *, seq=SEQ_LEN, batch=BATCH):
    """Equivalent of bmi_LSTM.forward(input_layer, h_t, c_t)."""
    in_size = prepared["in_size"]
    hidden = prepared["hidden"]
    hp = prepared["hidden_p"]

    x = input_layer.astype(jnp.float32).reshape(seq * batch, in_size)

    # Zero-pad initial states into the padded hidden lanes.
    h0 = jnp.zeros((batch, hp), jnp.float32).at[:, :hidden].set(
        h_t.astype(jnp.float32).reshape(batch, hidden))
    c0 = jnp.zeros((batch, hp), jnp.float32).at[:, :hidden].set(
        c_t.astype(jnp.float32).reshape(batch, hidden))

    kernel = functools.partial(
        _lstm_head_kernel, seq=seq, batch=batch, hidden_p=hp
    )
    vmem = pltpu.MemorySpace.VMEM

    pred, h_out, c_out = pl.pallas_call(
        kernel,
        out_shape=(
            jax.ShapeDtypeStruct((seq * batch, OUTPUT_SIZE), jnp.float32),
            jax.ShapeDtypeStruct((batch, hp), jnp.float32),
            jax.ShapeDtypeStruct((batch, hp), jnp.float32),
        ),
        in_specs=[pl.BlockSpec(memory_space=vmem)] * 8,
        out_specs=(
            pl.BlockSpec(memory_space=vmem),
            pl.BlockSpec(memory_space=vmem),
            pl.BlockSpec(memory_space=vmem),
        ),
    )(x, prepared["wih_t"], prepared["whh_t"], prepared["bias"],
      prepared["whead_row"], prepared["bhead"], h0, c0)

    prediction = pred.reshape(seq, batch, OUTPUT_SIZE)
    h_final = h_out[:, :hidden].reshape(1, batch, hidden)
    c_final = c_out[:, :hidden].reshape(1, batch, hidden)
    return prediction, h_final, c_final


def init_params(key, input_size=INPUT_SIZE, hidden=HIDDEN, output=OUTPUT_SIZE):
    """Deterministic init mimicking PyTorch's uniform(-1/sqrt(H), 1/sqrt(H))."""
    k = 1.0 / np.sqrt(hidden)
    ks = jax.random.split(key, 6)
    u = lambda kk, shape: jax.random.uniform(kk, shape, jnp.float32, -k, k)
    return {
        "w_ih": u(ks[0], (4 * hidden, input_size)),
        "w_hh": u(ks[1], (4 * hidden, hidden)),
        "b_ih": u(ks[2], (4 * hidden,)),
        "b_hh": u(ks[3], (4 * hidden,)),
        "w_head": u(ks[4], (output, hidden)),
        "b_head": u(ks[5], (output,)),
    }


def reference_forward(params, input_layer, h_t, c_t, *, seq=SEQ_LEN, batch=BATCH):
    """Pure-JAX reference matching torch.nn.LSTM + nn.Linear semantics."""
    in_size = params["w_ih"].shape[1]
    hidden = params["w_hh"].shape[1]
    x = input_layer.astype(jnp.float32).reshape(seq, batch, in_size)
    h = h_t.astype(jnp.float32).reshape(batch, hidden)
    c = c_t.astype(jnp.float32).reshape(batch, hidden)
    outs = []
    for t in range(seq):
        g = (x[t] @ params["w_ih"].T + params["b_ih"]
             + h @ params["w_hh"].T + params["b_hh"])
        i_g = jax.nn.sigmoid(g[:, 0:hidden])
        f_g = jax.nn.sigmoid(g[:, hidden:2 * hidden])
        g_g = jnp.tanh(g[:, 2 * hidden:3 * hidden])
        o_g = jax.nn.sigmoid(g[:, 3 * hidden:4 * hidden])
        c = f_g * c + i_g * g_g
        h = o_g * jnp.tanh(c)
        outs.append(h)
    out = jnp.stack(outs, axis=0)                       # (S, B, H)
    pred = out @ params["w_head"].T + params["b_head"]  # (S, B, 1)
    return pred, h[None], c[None]


if __name__ == "__main__":
    key = jax.random.PRNGKey(0)
    k_params, k_x, k_h, k_c = jax.random.split(key, 4)

    params = init_params(k_params)
    prepared = prepare_params(params)   # one-time transpose/cast/pad (not per call)

    # bmi_LSTM.update() feeds a (seq_length, input_size) slab; forward views it
    # to (seq, batch, input_size). h_t / c_t are (num_layers=1, batch, hidden).
    input_layer = jax.random.normal(k_x, (SEQ_LEN, INPUT_SIZE), jnp.float32)
    h_t = jax.random.normal(k_h, (1, BATCH, HIDDEN), jnp.float32)
    c_t = jax.random.normal(k_c, (1, BATCH, HIDDEN), jnp.float32)

    pred, h_out, c_out = bmi_lstm_forward(prepared, input_layer, h_t, c_t)
    jax.block_until_ready((pred, h_out, c_out))

    pred_ref, h_ref, c_ref = reference_forward(params, input_layer, h_t, c_t)
    np.testing.assert_allclose(np.asarray(pred), np.asarray(pred_ref), rtol=1e-4, atol=1e-4)
    np.testing.assert_allclose(np.asarray(h_out), np.asarray(h_ref), rtol=1e-4, atol=1e-4)
    np.testing.assert_allclose(np.asarray(c_out), np.asarray(c_ref), rtol=1e-4, atol=1e-4)

    assert pred.shape == (SEQ_LEN, BATCH, OUTPUT_SIZE)
    assert h_out.shape == (1, BATCH, HIDDEN) and c_out.shape == (1, BATCH, HIDDEN)
    print("KERNEL_OK")
</pallas_src>

<mosaic_0001>
module attributes {stable_mosaic.version = 11 : i64} {
  func.func @_lstm_head_kernel(%arg0: memref<8x11xf32, #tpu.memory_space<vmem>>, %arg1: memref<11x512xf32, #tpu.memory_space<vmem>>, %arg2: memref<128x512xf32, #tpu.memory_space<vmem>>, %arg3: memref<1x512xf32, #tpu.memory_space<vmem>>, %arg4: memref<1x128xf32, #tpu.memory_space<vmem>>, %arg5: memref<1x1xf32, #tpu.memory_space<vmem>>, %arg6: memref<1x128xf32, #tpu.memory_space<vmem>>, %arg7: memref<1x128xf32, #tpu.memory_space<vmem>>, %arg8: memref<8x1xf32, #tpu.memory_space<vmem>>, %arg9: memref<1x128xf32, #tpu.memory_space<vmem>>, %arg10: memref<1x128xf32, #tpu.memory_space<vmem>>) attributes {dimension_semantics = [], scalar_prefetch = 0 : i64, scratch_operands = 0 : i64, tpu.core_type = #tpu.core_type<tc>} {
    %c0 = arith.constant 0 : index
    %c0_0 = arith.constant 0 : index
    %0 = vector.load %arg0[%c0, %c0_0] : memref<8x11xf32, #tpu.memory_space<vmem>>, vector<8x11xf32>
    %c0_1 = arith.constant 0 : index
    %c0_2 = arith.constant 0 : index
    %1 = vector.load %arg1[%c0_1, %c0_2] : memref<11x512xf32, #tpu.memory_space<vmem>>, vector<11x512xf32>
    %cst = arith.constant dense<0.000000e+00> : vector<8x512xf32>
    %2 = tpu.matmul %0, %1, %cst {dimension_numbers = #tpu.dot_dimension_numbers<[1], [0], [0], [1], [0, 0, 1, 1], [], []>} : vector<8x11xf32>, vector<11x512xf32>, vector<8x512xf32> -> vector<8x512xf32>
    %c0_3 = arith.constant 0 : index
    %c0_4 = arith.constant 0 : index
    %3 = vector.load %arg3[%c0_3, %c0_4] : memref<1x512xf32, #tpu.memory_space<vmem>>, vector<1x512xf32>
    %4 = vector.broadcast %3 : vector<1x512xf32> to vector<8x512xf32>
    %5 = arith.addf %2, %4 : vector<8x512xf32>
    %c0_5 = arith.constant 0 : index
    %c0_6 = arith.constant 0 : index
    %6 = vector.load %arg2[%c0_5, %c0_6] : memref<128x512xf32, #tpu.memory_space<vmem>>, vector<128x512xf32>
    %c0_7 = arith.constant 0 : index
    %c0_8 = arith.constant 0 : index
    %7 = vector.load %arg6[%c0_7, %c0_8] : memref<1x128xf32, #tpu.memory_space<vmem>>, vector<1x128xf32>
    %c0_9 = arith.constant 0 : index
    %c0_10 = arith.constant 0 : index
    %8 = vector.load %arg7[%c0_9, %c0_10] : memref<1x128xf32, #tpu.memory_space<vmem>>, vector<1x128xf32>
    %9 = vector.extract_strided_slice %5 {offsets = [0, 0], sizes = [1, 512], strides = [1, 1]} : vector<8x512xf32> to vector<1x512xf32>
    %cst_11 = arith.constant dense<0.000000e+00> : vector<1x512xf32>
    %10 = tpu.matmul %7, %6, %cst_11 {dimension_numbers = #tpu.dot_dimension_numbers<[1], [0], [0], [1], [0, 0, 1, 1], [], []>} : vector<1x128xf32>, vector<128x512xf32>, vector<1x512xf32> -> vector<1x512xf32>
    %11 = arith.addf %9, %10 : vector<1x512xf32>
    %12 = vector.extract_strided_slice %11 {offsets = [0, 0], sizes = [1, 128], strides = [1, 1]} : vector<1x512xf32> to vector<1x128xf32>
    %13 = arith.negf %12 : vector<1x128xf32>
    %14 = math.exp %13 : vector<1x128xf32>
    %cst_12 = arith.constant 1.000000e+00 : f32
    %15 = vector.broadcast %cst_12 : f32 to vector<1x128xf32>
    %16 = arith.addf %15, %14 : vector<1x128xf32>
    %17 = arith.divf %15, %16 : vector<1x128xf32>
    %18 = vector.extract_strided_slice %11 {offsets = [0, 128], sizes = [1, 128], strides = [1, 1]} : vector<1x512xf32> to vector<1x128xf32>
    %19 = arith.negf %18 : vector<1x128xf32>
    %20 = math.exp %19 : vector<1x128xf32>
    %cst_13 = arith.constant 1.000000e+00 : f32
    %21 = vector.broadcast %cst_13 : f32 to vector<1x128xf32>
    %22 = arith.addf %21, %20 : vector<1x128xf32>
    %23 = arith.divf %21, %22 : vector<1x128xf32>
    %24 = vector.extract_strided_slice %11 {offsets = [0, 256], sizes = [1, 128], strides = [1, 1]} : vector<1x512xf32> to vector<1x128xf32>
    %25 = math.tanh %24 : vector<1x128xf32>
    %26 = vector.extract_strided_slice %11 {offsets = [0, 384], sizes = [1, 128], strides = [1, 1]} : vector<1x512xf32> to vector<1x128xf32>
    %27 = arith.negf %26 : vector<1x128xf32>
    %28 = math.exp %27 : vector<1x128xf32>
    %cst_14 = arith.constant 1.000000e+00 : f32
    %29 = vector.broadcast %cst_14 : f32 to vector<1x128xf32>
    %30 = arith.addf %29, %28 : vector<1x128xf32>
    %31 = arith.divf %29, %30 : vector<1x128xf32>
    %32 = arith.mulf %23, %8 : vector<1x128xf32>
    %33 = arith.mulf %17, %25 : vector<1x128xf32>
    %34 = arith.addf %32, %33 : vector<1x128xf32>
    %35 = math.tanh %34 : vector<1x128xf32>
    %36 = arith.mulf %31, %35 : vector<1x128xf32>
    %37 = vector.extract_strided_slice %5 {offsets = [1, 0], sizes = [1, 512], strides = [1, 1]} : vector<8x512xf32> to vector<1x512xf32>
    %cst_15 = arith.constant dense<0.000000e+00> : vector<1x512xf32>
    %38 = tpu.matmul %36, %6, %cst_15 {dimension_numbers = #tpu.dot_dimension_numbers<[1], [0], [0], [1], [0, 0, 1, 1], [], []>} : vector<1x128xf32>, vector<128x512xf32>, vector<1x512xf32> -> vector<1x512xf32>
    %39 = arith.addf %37, %38 : vector<1x512xf32>
    %40 = vector.extract_strided_slice %39 {offsets = [0, 0], sizes = [1, 128], strides = [1, 1]} : vector<1x512xf32> to vector<1x128xf32>
    %41 = arith.negf %40 : vector<1x128xf32>
    %42 = math.exp %41 : vector<1x128xf32>
    %cst_16 = arith.constant 1.000000e+00 : f32
    %43 = vector.broadcast %cst_16 : f32 to vector<1x128xf32>
    %44 = arith.addf %43, %42 : vector<1x128xf32>
    %45 = arith.divf %43, %44 : vector<1x128xf32>
    %46 = vector.extract_strided_slice %39 {offsets = [0, 128], sizes = [1, 128], strides = [1, 1]} : vector<1x512xf32> to vector<1x128xf32>
    %47 = arith.negf %46 : vector<1x128xf32>
    %48 = math.exp %47 : vector<1x128xf32>
    %cst_17 = arith.constant 1.000000e+00 : f32
    %49 = vector.broadcast %cst_17 : f32 to vector<1x128xf32>
    %50 = arith.addf %49, %48 : vector<1x128xf32>
    %51 = arith.divf %49, %50 : vector<1x128xf32>
    %52 = vector.extract_strided_slice %39 {offsets = [0, 256], sizes = [1, 128], strides = [1, 1]} : vector<1x512xf32> to vector<1x128xf32>
    %53 = math.tanh %52 : vector<1x128xf32>
    %54 = vector.extract_strided_slice %39 {offsets = [0, 384], sizes = [1, 128], strides = [1, 1]} : vector<1x512xf32> to vector<1x128xf32>
    %55 = arith.negf %54 : vector<1x128xf32>
    %56 = math.exp %55 : vector<1x128xf32>
    %cst_18 = arith.constant 1.000000e+00 : f32
    %57 = vector.broadcast %cst_18 : f32 to vector<1x128xf32>
    %58 = arith.addf %57, %56 : vector<1x128xf32>
    %59 = arith.divf %57, %58 : vector<1x128xf32>
    %60 = arith.mulf %51, %34 : vector<1x128xf32>
    %61 = arith.mulf %45, %53 : vector<1x128xf32>
    %62 = arith.addf %60, %61 : vector<1x128xf32>
    %63 = math.tanh %62 : vector<1x128xf32>
    %64 = arith.mulf %59, %63 : vector<1x128xf32>
    %65 = vector.extract_strided_slice %5 {offsets = [2, 0], sizes = [1, 512], strides = [1, 1]} : vector<8x512xf32> to vector<1x512xf32>
    %cst_19 = arith.constant dense<0.000000e+00> : vector<1x512xf32>
    %66 = tpu.matmul %64, %6, %cst_19 {dimension_numbers = #tpu.dot_dimension_numbers<[1], [0], [0], [1], [0, 0, 1, 1], [], []>} : vector<1x128xf32>, vector<128x512xf32>, vector<1x512xf32> -> vector<1x512xf32>
    %67 = arith.addf %65, %66 : vector<1x512xf32>
    %68 = vector.extract_strided_slice %67 {offsets = [0, 0], sizes = [1, 128], strides = [1, 1]} : vector<1x512xf32> to vector<1x128xf32>
    %69 = arith.negf %68 : vector<1x128xf32>
    %70 = math.exp %69 : vector<1x128xf32>
    %cst_20 = arith.constant 1.000000e+00 : f32
    %71 = vector.broadcast %cst_20 : f32 to vector<1x128xf32>
    %72 = arith.addf %71, %70 : vector<1x128xf32>
    %73 = arith.divf %71, %72 : vector<1x128xf32>
    %74 = vector.extract_strided_slice %67 {offsets = [0, 128], sizes = [1, 128], strides = [1, 1]} : vector<1x512xf32> to vector<1x128xf32>
    %75 = arith.negf %74 : vector<1x128xf32>
    %76 = math.exp %75 : vector<1x128xf32>
    %cst_21 = arith.constant 1.000000e+00 : f32
    %77 = vector.broadcast %cst_21 : f32 to vector<1x128xf32>
    %78 = arith.addf %77, %76 : vector<1x128xf32>
    %79 = arith.divf %77, %78 : vector<1x128xf32>
    %80 = vector.extract_strided_slice %67 {offsets = [0, 256], sizes = [1, 128], strides = [1, 1]} : vector<1x512xf32> to vector<1x128xf32>
    %81 = math.tanh %80 : vector<1x128xf32>
    %82 = vector.extract_strided_slice %67 {offsets = [0, 384], sizes = [1, 128], strides = [1, 1]} : vector<1x512xf32> to vector<1x128xf32>
    %83 = arith.negf %82 : vector<1x128xf32>
    %84 = math.exp %83 : vector<1x128xf32>
    %cst_22 = arith.constant 1.000000e+00 : f32
    %85 = vector.broadcast %cst_22 : f32 to vector<1x128xf32>
    %86 = arith.addf %85, %84 : vector<1x128xf32>
    %87 = arith.divf %85, %86 : vector<1x128xf32>
    %88 = arith.mulf %79, %62 : vector<1x128xf32>
    %89 = arith.mulf %73, %81 : vector<1x128xf32>
    %90 = arith.addf %88, %89 : vector<1x128xf32>
    %91 = math.tanh %90 : vector<1x128xf32>
    %92 = arith.mulf %87, %91 : vector<1x128xf32>
    %93 = vector.extract_strided_slice %5 {offsets = [3, 0], sizes = [1, 512], strides = [1, 1]} : vector<8x512xf32> to vector<1x512xf32>
    %cst_23 = arith.constant dense<0.000000e+00> : vector<1x512xf32>
    %94 = tpu.matmul %92, %6, %cst_23 {dimension_numbers = #tpu.dot_dimension_numbers<[1], [0], [0], [1], [0, 0, 1, 1], [], []>} : vector<1x128xf32>, vector<128x512xf32>, vector<1x512xf32> -> vector<1x512xf32>
    %95 = arith.addf %93, %94 : vector<1x512xf32>
    %96 = vector.extract_strided_slice %95 {offsets = [0, 0], sizes = [1, 128], strides = [1, 1]} : vector<1x512xf32> to vector<1x128xf32>
    %97 = arith.negf %96 : vector<1x128xf32>
    %98 = math.exp %97 : vector<1x128xf32>
    %cst_24 = arith.constant 1.000000e+00 : f32
    %99 = vector.broadcast %cst_24 : f32 to vector<1x128xf32>
    %100 = arith.addf %99, %98 : vector<1x128xf32>
    %101 = arith.divf %99, %100 : vector<1x128xf32>
    %102 = vector.extract_strided_slice %95 {offsets = [0, 128], sizes = [1, 128], strides = [1, 1]} : vector<1x512xf32> to vector<1x128xf32>
    %103 = arith.negf %102 : vector<1x128xf32>
    %104 = math.exp %103 : vector<1x128xf32>
    %cst_25 = arith.constant 1.000000e+00 : f32
    %105 = vector.broadcast %cst_25 : f32 to vector<1x128xf32>
    %106 = arith.addf %105, %104 : vector<1x128xf32>
    %107 = arith.divf %105, %106 : vector<1x128xf32>
    %108 = vector.extract_strided_slice %95 {offsets = [0, 256], sizes = [1, 128], strides = [1, 1]} : vector<1x512xf32> to vector<1x128xf32>
    %109 = math.tanh %108 : vector<1x128xf32>
    %110 = vector.extract_strided_slice %95 {offsets = [0, 384], sizes = [1, 128], strides = [1, 1]} : vector<1x512xf32> to vector<1x128xf32>
    %111 = arith.negf %110 : vector<1x128xf32>
    %112 = math.exp %111 : vector<1x128xf32>
    %cst_26 = arith.constant 1.000000e+00 : f32
    %113 = vector.broadcast %cst_26 : f32 to vector<1x128xf32>
    %114 = arith.addf %113, %112 : vector<1x128xf32>
    %115 = arith.divf %113, %114 : vector<1x128xf32>
    %116 = arith.mulf %107, %90 : vector<1x128xf32>
    %117 = arith.mulf %101, %109 : vector<1x128xf32>
    %118 = arith.addf %116, %117 : vector<1x128xf32>
    %119 = math.tanh %118 : vector<1x128xf32>
    %120 = arith.mulf %115, %119 : vector<1x128xf32>
    %121 = vector.extract_strided_slice %5 {offsets = [4, 0], sizes = [1, 512], strides = [1, 1]} : vector<8x512xf32> to vector<1x512xf32>
    %cst_27 = arith.constant dense<0.000000e+00> : vector<1x512xf32>
    %122 = tpu.matmul %120, %6, %cst_27 {dimension_numbers = #tpu.dot_dimension_numbers<[1], [0], [0], [1], [0, 0, 1, 1], [], []>} : vector<1x128xf32>, vector<128x512xf32>, vector<1x512xf32> -> vector<1x512xf32>
    %123 = arith.addf %121, %122 : vector<1x512xf32>
    %124 = vector.extract_strided_slice %123 {offsets = [0, 0], sizes = [1, 128], strides = [1, 1]} : vector<1x512xf32> to vector<1x128xf32>
    %125 = arith.negf %124 : vector<1x128xf32>
    %126 = math.exp %125 : vector<1x128xf32>
    %cst_28 = arith.constant 1.000000e+00 : f32
    %127 = vector.broadcast %cst_28 : f32 to vector<1x128xf32>
    %128 = arith.addf %127, %126 : vector<1x128xf32>
    %129 = arith.divf %127, %128 : vector<1x128xf32>
    %130 = vector.extract_strided_slice %123 {offsets = [0, 128], sizes = [1, 128], strides = [1, 1]} : vector<1x512xf32> to vector<1x128xf32>
    %131 = arith.negf %130 : vector<1x128xf32>
    %132 = math.exp %131 : vector<1x128xf32>
    %cst_29 = arith.constant 1.000000e+00 : f32
    %133 = vector.broadcast %cst_29 : f32 to vector<1x128xf32>
    %134 = arith.addf %133, %132 : vector<1x128xf32>
    %135 = arith.divf %133, %134 : vector<1x128xf32>
    %136 = vector.extract_strided_slice %123 {offsets = [0, 256], sizes = [1, 128], strides = [1, 1]} : vector<1x512xf32> to vector<1x128xf32>
    %137 = math.tanh %136 : vector<1x128xf32>
    %138 = vector.extract_strided_slice %123 {offsets = [0, 384], sizes = [1, 128], strides = [1, 1]} : vector<1x512xf32> to vector<1x128xf32>
    %139 = arith.negf %138 : vector<1x128xf32>
    %140 = math.exp %139 : vector<1x128xf32>
    %cst_30 = arith.constant 1.000000e+00 : f32
    %141 = vector.broadcast %cst_30 : f32 to vector<1x128xf32>
    %142 = arith.addf %141, %140 : vector<1x128xf32>
    %143 = arith.divf %141, %142 : vector<1x128xf32>
    %144 = arith.mulf %135, %118 : vector<1x128xf32>
    %145 = arith.mulf %129, %137 : vector<1x128xf32>
    %146 = arith.addf %144, %145 : vector<1x128xf32>
    %147 = math.tanh %146 : vector<1x128xf32>
    %148 = arith.mulf %143, %147 : vector<1x128xf32>
    %149 = vector.extract_strided_slice %5 {offsets = [5, 0], sizes = [1, 512], strides = [1, 1]} : vector<8x512xf32> to vector<1x512xf32>
    %cst_31 = arith.constant dense<0.000000e+00> : vector<1x512xf32>
    %150 = tpu.matmul %148, %6, %cst_31 {dimension_numbers = #tpu.dot_dimension_numbers<[1], [0], [0], [1], [0, 0, 1, 1], [], []>} : vector<1x128xf32>, vector<128x512xf32>, vector<1x512xf32> -> vector<1x512xf32>
    %151 = arith.addf %149, %150 : vector<1x512xf32>
    %152 = vector.extract_strided_slice %151 {offsets = [0, 0], sizes = [1, 128], strides = [1, 1]} : vector<1x512xf32> to vector<1x128xf32>
    %153 = arith.negf %152 : vector<1x128xf32>
    %154 = math.exp %153 : vector<1x128xf32>
    %cst_32 = arith.constant 1.000000e+00 : f32
    %155 = vector.broadcast %cst_32 : f32 to vector<1x128xf32>
    %156 = arith.addf %155, %154 : vector<1x128xf32>
    %157 = arith.divf %155, %156 : vector<1x128xf32>
    %158 = vector.extract_strided_slice %151 {offsets = [0, 128], sizes = [1, 128], strides = [1, 1]} : vector<1x512xf32> to vector<1x128xf32>
    %159 = arith.negf %158 : vector<1x128xf32>
    %160 = math.exp %159 : vector<1x128xf32>
    %cst_33 = arith.constant 1.000000e+00 : f32
    %161 = vector.broadcast %cst_33 : f32 to vector<1x128xf32>
    %162 = arith.addf %161, %160 : vector<1x128xf32>
    %163 = arith.divf %161, %162 : vector<1x128xf32>
    %164 = vector.extract_strided_slice %151 {offsets = [0, 256], sizes = [1, 128], strides = [1, 1]} : vector<1x512xf32> to vector<1x128xf32>
    %165 = math.tanh %164 : vector<1x128xf32>
    %166 = vector.extract_strided_slice %151 {offsets = [0, 384], sizes = [1, 128], strides = [1, 1]} : vector<1x512xf32> to vector<1x128xf32>
    %167 = arith.negf %166 : vector<1x128xf32>
    %168 = math.exp %167 : vector<1x128xf32>
    %cst_34 = arith.constant 1.000000e+00 : f32
    %169 = vector.broadcast %cst_34 : f32 to vector<1x128xf32>
    %170 = arith.addf %169, %168 : vector<1x128xf32>
    %171 = arith.divf %169, %170 : vector<1x128xf32>
    %172 = arith.mulf %163, %146 : vector<1x128xf32>
    %173 = arith.mulf %157, %165 : vector<1x128xf32>
    %174 = arith.addf %172, %173 : vector<1x128xf32>
    %175 = math.tanh %174 : vector<1x128xf32>
    %176 = arith.mulf %171, %175 : vector<1x128xf32>
    %177 = vector.extract_strided_slice %5 {offsets = [6, 0], sizes = [1, 512], strides = [1, 1]} : vector<8x512xf32> to vector<1x512xf32>
    %cst_35 = arith.constant dense<0.000000e+00> : vector<1x512xf32>
    %178 = tpu.matmul %176, %6, %cst_35 {dimension_numbers = #tpu.dot_dimension_numbers<[1], [0], [0], [1], [0, 0, 1, 1], [], []>} : vector<1x128xf32>, vector<128x512xf32>, vector<1x512xf32> -> vector<1x512xf32>
    %179 = arith.addf %177, %178 : vector<1x512xf32>
    %180 = vector.extract_strided_slice %179 {offsets = [0, 0], sizes = [1, 128], strides = [1, 1]} : vector<1x512xf32> to vector<1x128xf32>
    %181 = arith.negf %180 : vector<1x128xf32>
    %182 = math.exp %181 : vector<1x128xf32>
    %cst_36 = arith.constant 1.000000e+00 : f32
    %183 = vector.broadcast %cst_36 : f32 to vector<1x128xf32>
    %184 = arith.addf %183, %182 : vector<1x128xf32>
    %185 = arith.divf %183, %184 : vector<1x128xf32>
    %186 = vector.extract_strided_slice %179 {offsets = [0, 128], sizes = [1, 128], strides = [1, 1]} : vector<1x512xf32> to vector<1x128xf32>
    %187 = arith.negf %186 : vector<1x128xf32>
    %188 = math.exp %187 : vector<1x128xf32>
    %cst_37 = arith.constant 1.000000e+00 : f32
    %189 = vector.broadcast %cst_37 : f32 to vector<1x128xf32>
    %190 = arith.addf %189, %188 : vector<1x128xf32>
    %191 = arith.divf %189, %190 : vector<1x128xf32>
    %192 = vector.extract_strided_slice %179 {offsets = [0, 256], sizes = [1, 128], strides = [1, 1]} : vector<1x512xf32> to vector<1x128xf32>
    %193 = math.tanh %192 : vector<1x128xf32>
    %194 = vector.extract_strided_slice %179 {offsets = [0, 384], sizes = [1, 128], strides = [1, 1]} : vector<1x512xf32> to vector<1x128xf32>
    %195 = arith.negf %194 : vector<1x128xf32>
    %196 = math.exp %195 : vector<1x128xf32>
    %cst_38 = arith.constant 1.000000e+00 : f32
    %197 = vector.broadcast %cst_38 : f32 to vector<1x128xf32>
    %198 = arith.addf %197, %196 : vector<1x128xf32>
    %199 = arith.divf %197, %198 : vector<1x128xf32>
    %200 = arith.mulf %191, %174 : vector<1x128xf32>
    %201 = arith.mulf %185, %193 : vector<1x128xf32>
    %202 = arith.addf %200, %201 : vector<1x128xf32>
    %203 = math.tanh %202 : vector<1x128xf32>
    %204 = arith.mulf %199, %203 : vector<1x128xf32>
    %205 = vector.extract_strided_slice %5 {offsets = [7, 0], sizes = [1, 512], strides = [1, 1]} : vector<8x512xf32> to vector<1x512xf32>
    %cst_39 = arith.constant dense<0.000000e+00> : vector<1x512xf32>
    %206 = tpu.matmul %204, %6, %cst_39 {dimension_numbers = #tpu.dot_dimension_numbers<[1], [0], [0], [1], [0, 0, 1, 1], [], []>} : vector<1x128xf32>, vector<128x512xf32>, vector<1x512xf32> -> vector<1x512xf32>
    %207 = arith.addf %205, %206 : vector<1x512xf32>
    %208 = vector.extract_strided_slice %207 {offsets = [0, 0], sizes = [1, 128], strides = [1, 1]} : vector<1x512xf32> to vector<1x128xf32>
    %209 = arith.negf %208 : vector<1x128xf32>
    %210 = math.exp %209 : vector<1x128xf32>
    %cst_40 = arith.constant 1.000000e+00 : f32
    %211 = vector.broadcast %cst_40 : f32 to vector<1x128xf32>
    %212 = arith.addf %211, %210 : vector<1x128xf32>
    %213 = arith.divf %211, %212 : vector<1x128xf32>
    %214 = vector.extract_strided_slice %207 {offsets = [0, 128], sizes = [1, 128], strides = [1, 1]} : vector<1x512xf32> to vector<1x128xf32>
    %215 = arith.negf %214 : vector<1x128xf32>
    %216 = math.exp %215 : vector<1x128xf32>
    %cst_41 = arith.constant 1.000000e+00 : f32
    %217 = vector.broadcast %cst_41 : f32 to vector<1x128xf32>
    %218 = arith.addf %217, %216 : vector<1x128xf32>
    %219 = arith.divf %217, %218 : vector<1x128xf32>
    %220 = vector.extract_strided_slice %207 {offsets = [0, 256], sizes = [1, 128], strides = [1, 1]} : vector<1x512xf32> to vector<1x128xf32>
    %221 = math.tanh %220 : vector<1x128xf32>
    %222 = vector.extract_strided_slice %207 {offsets = [0, 384], sizes = [1, 128], strides = [1, 1]} : vector<1x512xf32> to vector<1x128xf32>
    %223 = arith.negf %222 : vector<1x128xf32>
    %224 = math.exp %223 : vector<1x128xf32>
    %cst_42 = arith.constant 1.000000e+00 : f32
    %225 = vector.broadcast %cst_42 : f32 to vector<1x128xf32>
    %226 = arith.addf %225, %224 : vector<1x128xf32>
    %227 = arith.divf %225, %226 : vector<1x128xf32>
    %228 = arith.mulf %219, %202 : vector<1x128xf32>
    %229 = arith.mulf %213, %221 : vector<1x128xf32>
    %230 = arith.addf %228, %229 : vector<1x128xf32>
    %231 = math.tanh %230 : vector<1x128xf32>
    %232 = arith.mulf %227, %231 : vector<1x128xf32>
    %c0_43 = arith.constant 0 : index
    %c0_44 = arith.constant 0 : index
    %233 = vector.load %arg9[%c0_43, %c0_44] : memref<1x128xf32, #tpu.memory_space<vmem>>, vector<1x128xf32>
    tpu.vector_store %arg9[%c0_43, %c0_44], %232 {strides = array<i32>} : memref<1x128xf32, #tpu.memory_space<vmem>>, vector<1x128xf32>,
    %c0_45 = arith.constant 0 : index
    %c0_46 = arith.constant 0 : index
    %234 = vector.load %arg10[%c0_45, %c0_46] : memref<1x128xf32, #tpu.memory_space<vmem>>, vector<1x128xf32>
    tpu.vector_store %arg10[%c0_45, %c0_46], %230 {strides = array<i32>} : memref<1x128xf32, #tpu.memory_space<vmem>>, vector<1x128xf32>,
    %235 = tpu.concatenate %36, %64, %92, %120, %148, %176, %204, %232 in 0 : vector<1x128xf32>, vector<1x128xf32>, vector<1x128xf32>, vector<1x128xf32>, vector<1x128xf32>, vector<1x128xf32>, vector<1x128xf32>, vector<1x128xf32> -> vector<8x128xf32>
    %c0_47 = arith.constant 0 : index
    %c0_48 = arith.constant 0 : index
    %236 = vector.load %arg4[%c0_47, %c0_48] : memref<1x128xf32, #tpu.memory_space<vmem>>, vector<1x128xf32>
    %237 = vector.broadcast %236 : vector<1x128xf32> to vector<8x128xf32>
    %238 = arith.mulf %235, %237 : vector<8x128xf32>
    %cst_49 = arith.constant dense<0.000000e+00> : vector<8xf32>
    %239 = vector.multi_reduction <add>, %238, %cst_49 [1] : vector<8x128xf32> to vector<8xf32>
    %240 = vector.shape_cast %239 : vector<8xf32> to vector<8x1xf32>
    %c0_50 = arith.constant 0 : index
    %c0_51 = arith.constant 0 : index
    %241 = vector.load %arg5[%c0_50, %c0_51] : memref<1x1xf32, #tpu.memory_space<vmem>>, vector<1x1xf32>
    %242 = vector.broadcast %241 : vector<1x1xf32> to vector<8x1xf32>
    %243 = arith.addf %240, %242 : vector<8x1xf32>
    %c0_52 = arith.constant 0 : index
    %c0_53 = arith.constant 0 : index
    %244 = vector.load %arg8[%c0_52, %c0_53] : memref<8x1xf32, #tpu.memory_space<vmem>>, vector<8x1xf32>
    tpu.vector_store %arg8[%c0_52, %c0_53], %243 {strides = array<i32>} : memref<8x1xf32, #tpu.memory_space<vmem>>, vector<8x1xf32>,
    return
  }
}

</mosaic_0001>

<llo_original>
// kernel: tpu_custom_call.1
$region0: #{tpu_custom_call.1}
  #allocation0 [shape = 'u32[]', space=smem, size = 0x4, offset = 0x4, fixed_abs, tag = 'smem constant byte address 0x4 - core index']
  #allocation1 [shape = 'u32[72,128]{1,0:T(1,128)}', space=vmem, size = 0x9000, scoped, tag = 'internal scratch']
  #allocation2 [shape = 'f32[1,1]{1,0:T(1,128)S(1)}', space=vmem, size = 0x200, scoped, tag = 'scoped memory for tpu_custom_call.1']
  %s0 = inlined_call_operand.hbm [shape: f32[8,11], index: 0, kind: input, shape index: {}]
  %s1 = inlined_call_operand.hbm [shape: f32[11,512], index: 1, kind: input, shape index: {}]
  %s2 = inlined_call_operand.hbm [shape: f32[128,512], index: 2, kind: input, shape index: {}]
  %s3 = inlined_call_operand.vmem [shape: f32[1,512], index: 3, kind: input, shape index: {}]
  %s4 = inlined_call_operand.vmem [shape: f32[1,128], index: 4, kind: input, shape index: {}]
  %s5 = inlined_call_operand.<no memory space> [shape: f32[1,1], index: 5, kind: input, shape index: {}]
  %s6 = inlined_call_operand.vmem [shape: f32[1,128], index: 6, kind: input, shape index: {}]
  %s7 = inlined_call_operand.vmem [shape: f32[1,128], index: 7, kind: input, shape index: {}]
  %s8 = inlined_call_operand.vmem [shape: f32[8,1], index: 8, kind: output, shape index: {0}]
  %s9 = inlined_call_operand.hbm [shape: f32[1,128], index: 9, kind: output, shape index: {1}]
  %s10 = inlined_call_operand.hbm [shape: f32[1,128], index: 10, kind: output, shape index: {2}]
  %11 = xla_tuple %s8, %s9, %s10
  %s12 = sld [smem:[#allocation0]]
  $region70: #{tpu_custom_call.1} parent=0
    _
  %s14 = ssub.s32 1, %s12
  %s15 = scalar_select 0, %s14, %s12
  %v16 = vstv %s5
  %17 = vst [vmem:[#allocation2] sm:$0x1] %v16
  $region1: #{tpu_custom_call.1} parent=0
    #allocation3 [shape = 'u8[4096]{0}', space=vmem, size = 0x1000, scoped, tag = 'input window, operand 0, single buffered']
    #allocation4 [shape = 's32[1]{0}', space=sflag, size = 0x4, scoped, tag = 'scoped memory for tpu_custom_call.1']
    #allocation5 [shape = 's32[1]{0}', space=sflag, size = 0x4, scoped, tag = 'scoped memory for tpu_custom_call.1']
    #allocation6 [shape = 'u8[32768]{0}', space=vmem, size = 0x8000, scoped, tag = 'input window, operand 1, single buffered']
    #allocation7 [shape = 's32[1]{0}', space=sflag, size = 0x4, scoped, tag = 'scoped memory for tpu_custom_call.1']
    #allocation8 [shape = 'u8[262144]{0}', space=vmem, size = 0x40000, scoped, tag = 'input window, operand 2, single buffered']
    #allocation9 [shape = 'u8[512]{0}', space=vmem, size = 0x400, scoped, tag = 'output window, operand 1, single buffered']
    #allocation10 [shape = 'u8[512]{0}', space=vmem, size = 0x400, scoped, tag = 'output window, operand 2, single buffered']
    #allocation11 [shape = 's32[1]{0}', space=sflag, size = 0x4, scoped, tag = 'scoped memory for tpu_custom_call.1']
    %18 = vsyncpa [#allocation4], 0
    %19 = vsyncpa [#allocation7], 0
    %20 = vsyncpa [#allocation5], 0
    %21 = vsyncpa [#allocation11], 0
    // Predicated region
    $region2: #{tpu_custom_call.1} parent=1 // pred_check
      _
    $region3: #{tpu_custom_call.1} parent=1 // pred_check_branch
      %23 = sbr.rel (0) target = $region5
    $region4: #{tpu_custom_call.1} parent=1 // pred_region
      %25 = vsyncadd [#allocation4], 0
      %s27 = sshll.u32 %s0, 4
      %s28 = int_to_ptr.hbm [resolvable:$true] %s27
      %s29 = sshll.u32 [#allocation3], 4
      %s30 = int_to_ptr.vmem [resolvable:$true] %s29
      %32 = dma.hbm_to_vmem [thread:$0]  %s28, 128, %s30, [#allocation4]
    $region5: #{tpu_custom_call.1} parent=1 // pred_fallthru
      _
    // Predicated region
    $region6: #{tpu_custom_call.1} parent=1 // pred_check
      _
    $region7: #{tpu_custom_call.1} parent=1 // pred_check_branch
      %34 = sbr.rel (0) target = $region9
    $region8: #{tpu_custom_call.1} parent=1 // pred_region
      %36 = vsyncadd [#allocation7], 0
      %s37 = sshll.u32 %s1, 4
      %s38 = int_to_ptr.hbm [resolvable:$true] %s37
      %s39 = sshll.u32 [#allocation6], 4
      %s40 = int_to_ptr.vmem [resolvable:$true] %s39
      %45 = dma.hbm_to_vmem [thread:$0]  %s38, 1024, %s40, [#allocation7], 512, 512, 32
    $region9: #{tpu_custom_call.1} parent=1 // pred_fallthru
      _
    // Predicated region
    $region10: #{tpu_custom_call.1} parent=1 // pred_check
      _
    $region11: #{tpu_custom_call.1} parent=1 // pred_check_branch
      %47 = sbr.rel (0) target = $region13
    $region12: #{tpu_custom_call.1} parent=1 // pred_region
      %49 = vsyncadd [#allocation7], 0
      %s50 = sshll.u32 %s2, 4
      %s51 = int_to_ptr.hbm [resolvable:$true] %s50
      %s52 = sshll.u32 [#allocation8], 4
      %s53 = int_to_ptr.vmem [resolvable:$true] %s52
      %58 = dma.hbm_to_vmem [thread:$0]  %s51, 8192, %s53, [#allocation7], 512, 512, 32
    $region13: #{tpu_custom_call.1} parent=1 // pred_fallthru
      _
    // Predicated region
    $region14: #{tpu_custom_call.1} parent=1 // pred_check
      _
    $region15: #{tpu_custom_call.1} parent=1 // pred_check_branch
      %60 = sbr.rel (0) target = $region17
    $region16: #{tpu_custom_call.1} parent=1 // pred_region
      _
    $region17: #{tpu_custom_call.1} parent=1 // pred_fallthru
      _
    // Predicated region
    $region18: #{tpu_custom_call.1} parent=1 // pred_check
      _
    $region19: #{tpu_custom_call.1} parent=1 // pred_check_branch
      %62 = sbr.rel (0) target = $region21
    $region20: #{tpu_custom_call.1} parent=1 // pred_region
      _
    $region21: #{tpu_custom_call.1} parent=1 // pred_fallthru
      _
    // Predicated region
    $region22: #{tpu_custom_call.1} parent=1 // pred_check
      _
    $region23: #{tpu_custom_call.1} parent=1 // pred_check_branch
      %64 = sbr.rel (0) target = $region25
    $region24: #{tpu_custom_call.1} parent=1 // pred_region
      _
    $region25: #{tpu_custom_call.1} parent=1 // pred_fallthru
      _
    // Predicated region
    $region26: #{tpu_custom_call.1} parent=1 // pred_check
      _
    $region27: #{tpu_custom_call.1} parent=1 // pred_check_branch
      %66 = sbr.rel (0) target = $region29
    $region28: #{tpu_custom_call.1} parent=1 // pred_region
      _
    $region29: #{tpu_custom_call.1} parent=1 // pred_fallthru
      _
    // Predicated region
    $region30: #{tpu_custom_call.1} parent=1 // pred_check
      _
    $region31: #{tpu_custom_call.1} parent=1 // pred_check_branch
      %68 = sbr.rel (0) target = $region33
    $region32: #{tpu_custom_call.1} parent=1 // pred_region
      _
    $region33: #{tpu_custom_call.1} parent=1 // pred_fallthru
      _
    // Predicated region
    $region34: #{tpu_custom_call.1} parent=1 // pred_check
      _
    $region35: #{tpu_custom_call.1} parent=1 // pred_check_branch
      %70 = sbr.rel (0) target = $region37
    $region36: #{tpu_custom_call.1} parent=1 // pred_region
      %72 = dma.done [#allocation4], 128
    $region37: #{tpu_custom_call.1} parent=1 // pred_fallthru
      _
    // Predicated region
    $region38: #{tpu_custom_call.1} parent=1 // pred_check
      _
    $region39: #{tpu_custom_call.1} parent=1 // pred_check_branch
      %74 = sbr.rel (0) target = $region41
    $region40: #{tpu_custom_call.1} parent=1 // pred_region
      %76 = dma.done [#allocation7], 1024
    $region41: #{tpu_custom_call.1} parent=1 // pred_fallthru
      _
    // Predicated region
    $region42: #{tpu_custom_call.1} parent=1 // pred_check
      _
    $region43: #{tpu_custom_call.1} parent=1 // pred_check_branch
      %78 = sbr.rel (0) target = $region45
    $region44: #{tpu_custom_call.1} parent=1 // pred_region
      %80 = dma.done [#allocation7], 8192
    $region45: #{tpu_custom_call.1} parent=1 // pred_fallthru
      _
    %v81 = vld [vmem:[#allocation3] sm:$0xff]
    %v82 = vld [vmem:[#allocation6] sm:$0xff]
    %v83 = vld [vmem:[#allocation6 + $0x8] sm:$0xff]
    %v84 = vld [vmem:[#allocation6 + $0x10] sm:$0xff]
    %v85 = vld [vmem:[#allocation6 + $0x18] sm:$0xff]
    %v86 = vld [vmem:[#allocation6 + $0x20] sm:$0x7]
    %v87 = vld [vmem:[#allocation6 + $0x28] sm:$0x7]
    %v88 = vld [vmem:[#allocation6 + $0x30] sm:$0x7]
    %v89 = vld [vmem:[#allocation6 + $0x38] sm:$0x7]
    %v90 = vld [vmem:[%s3] sm:$0xf]
    %v92 = vperm.slane %v90, 0
    %v93 = vperm.slane %v90, 1
    %v94 = vperm.slane %v90, 2
    %v95 = vperm.slane %v90, 3
    %vm100 = vcmask 89088
    %v102 = vsel %vm100, %v81, 0
    %vm104 = vcmask 1042432
    %v106 = vsel %vm104, %v86, 0
    %v109 = vsel %vm104, %v87, 0
    %v112 = vsel %vm104, %v88, 0
    %v115 = vsel %vm104, %v89, 0
    %117 = vmatpush.msra.mxu0 0.0
    %118 = vmatpush.msra.mxu0 0.0
    %119 = vmatpush.msra.mxu0 0.0
    %120 = vmatpush.msra.mxu0 0.0
    %121 = vmatpush.msra.mxu0 0.0
    %122 = vmatpush.msra.mxu0 0.0
    %123 = vmatpush.msra.mxu0 0.0
    %124 = vmatpush.msra.mxu0 0.0
    %125 = vmatpush.msra.mxu0 0.0
    %126 = vmatpush.msra.mxu0 0.0
    %127 = vmatpush.msra.mxu0 0.0
    %128 = vmatpush.msra.mxu0 0.0
    %129 = vmatpush.msra.mxu0 0.0
    %130 = vmatpush.msra.mxu0 0.0
    %131 = vmatpush.msra.mxu0 %v106
    %132 = vmatpush.msra.mxu0 %v82
    %133 = vmatmul.f32.gmra.mxu0 %v102
    %v134 = vpop.f32.mrf.mxu0
    %v135 = vadd.f32 %v92, %v134
    %136 = vdwg.mxu0
    %137 = vmatpush.msra.mxu0 0.0
    %138 = vmatpush.msra.mxu0 0.0
    %139 = vmatpush.msra.mxu0 0.0
    %140 = vmatpush.msra.mxu0 0.0
    %141 = vmatpush.msra.mxu0 0.0
    %142 = vmatpush.msra.mxu0 0.0
    %143 = vmatpush.msra.mxu0 0.0
    %144 = vmatpush.msra.mxu0 0.0
    %145 = vmatpush.msra.mxu0 0.0
    %146 = vmatpush.msra.mxu0 0.0
    %147 = vmatpush.msra.mxu0 0.0
    %148 = vmatpush.msra.mxu0 0.0
    %149 = vmatpush.msra.mxu0 0.0
    %150 = vmatpush.msra.mxu0 0.0
    %151 = vmatpush.msra.mxu0 %v109
    %152 = vmatpush.msra.mxu0 %v83
    %153 = vmatmul.f32.gmra.mxu0 %v102
    %v154 = vpop.f32.mrf.mxu0
    %v155 = vadd.f32 %v93, %v154
    %156 = vdwg.mxu0
    %157 = vmatpush.msra.mxu0 0.0
    %158 = vmatpush.msra.mxu0 0.0
    %159 = vmatpush.msra.mxu0 0.0
    %160 = vmatpush.msra.mxu0 0.0
    %161 = vmatpush.msra.mxu0 0.0
    %162 = vmatpush.msra.mxu0 0.0
    %163 = vmatpush.msra.mxu0 0.0
    %164 = vmatpush.msra.mxu0 0.0
    %165 = vmatpush.msra.mxu0 0.0
    %166 = vmatpush.msra.mxu0 0.0
    %167 = vmatpush.msra.mxu0 0.0
    %168 = vmatpush.msra.mxu0 0.0
    %169 = vmatpush.msra.mxu0 0.0
    %170 = vmatpush.msra.mxu0 0.0
    %171 = vmatpush.msra.mxu0 %v112
    %172 = vmatpush.msra.mxu0 %v84
    %173 = vmatmul.f32.gmra.mxu0 %v102
    %v174 = vpop.f32.mrf.mxu0
    %v175 = vadd.f32 %v94, %v174
    %176 = vdwg.mxu0
    %177 = vmatpush.msra.mxu0 0.0
    %178 = vmatpush.msra.mxu0 0.0
    %179 = vmatpush.msra.mxu0 0.0
    %180 = vmatpush.msra.mxu0 0.0
    %181 = vmatpush.msra.mxu0 0.0
    %182 = vmatpush.msra.mxu0 0.0
    %183 = vmatpush.msra.mxu0 0.0
    %184 = vmatpush.msra.mxu0 0.0
    %185 = vmatpush.msra.mxu0 0.0
    %186 = vmatpush.msra.mxu0 0.0
    %187 = vmatpush.msra.mxu0 0.0
    %188 = vmatpush.msra.mxu0 0.0
    %189 = vmatpush.msra.mxu0 0.0
    %190 = vmatpush.msra.mxu0 0.0
    %191 = vmatpush.msra.mxu0 %v115
    %192 = vmatpush.msra.mxu0 %v85
    %193 = vmatmul.f32.gmra.mxu0 %v102
    %v194 = vpop.f32.mrf.mxu0
    %v195 = vadd.f32 %v95, %v194
    %196 = vdwg.mxu0
    %v197 = vld [vmem:[#allocation8] sm:$0xff]
    %v198 = vld [vmem:[#allocation8 + $0x8] sm:$0xff]
    %v199 = vld [vmem:[#allocation8 + $0x10] sm:$0xff]
    %v200 = vld [vmem:[#allocation8 + $0x18] sm:$0xff]
    %v201 = vld [vmem:[#allocation8 + $0x20] sm:$0xff]
    %v202 = vld [vmem:[#allocation8 + $0x28] sm:$0xff]
    %v203 = vld [vmem:[#allocation8 + $0x30] sm:$0xff]
    %v204 = vld [vmem:[#allocation8 + $0x38] sm:$0xff]
    %v205 = vld [vmem:[#allocation8 + $0x40] sm:$0xff]
    %v206 = vld [vmem:[#allocation8 + $0x48] sm:$0xff]
    %v207 = vld [vmem:[#allocation8 + $0x50] sm:$0xff]
    %v208 = vld [vmem:[#allocation8 + $0x58] sm:$0xff]
    %v209 = vld [vmem:[#allocation8 + $0x60] sm:$0xff]
    %v210 = vld [vmem:[#allocation8 + $0x68] sm:$0xff]
    %v211 = vld [vmem:[#allocation8 + $0x70] sm:$0xff]
    %v212 = vld [vmem:[#allocation8 + $0x78] sm:$0xff]
    %v213 = vld [vmem:[#allocation8 + $0x80] sm:$0xff]
    %v214 = vld [vmem:[#allocation8 + $0x88] sm:$0xff]
    %v215 = vld [vmem:[#allocation8 + $0x90] sm:$0xff]
    %v216 = vld [vmem:[#allocation8 + $0x98] sm:$0xff]
    %v217 = vld [vmem:[#allocation8 + $0xa0] sm:$0xff]
    %v218 = vld [vmem:[#allocation8 + $0xa8] sm:$0xff]
    %v219 = vld [vmem:[#allocation8 + $0xb0] sm:$0xff]
    %v220 = vld [vmem:[#allocation8 + $0xb8] sm:$0xff]
    %v221 = vld [vmem:[#allocation8 + $0xc0] sm:$0xff]
    %v222 = vld [vmem:[#allocation8 + $0xc8] sm:$0xff]
    %v223 = vld [vmem:[#allocation8 + $0xd0] sm:$0xff]
    %v224 = vld [vmem:[#allocation8 + $0xd8] sm:$0xff]
    %v225 = vld [vmem:[#allocation8 + $0xe0] sm:$0xff]
    %v226 = vld [vmem:[#allocation8 + $0xe8] sm:$0xff]
    %v227 = vld [vmem:[#allocation8 + $0xf0] sm:$0xff]
    %v228 = vld [vmem:[#allocation8 + $0xf8] sm:$0xff]
    %v229 = vld [vmem:[#allocation8 + $0x100] sm:$0xff]
    %v230 = vld [vmem:[#allocation8 + $0x108] sm:$0xff]
    %v231 = vld [vmem:[#allocation8 + $0x110] sm:$0xff]
    %v232 = vld [vmem:[#allocation8 + $0x118] sm:$0xff]
    %v233 = vld [vmem:[#allocation8 + $0x120] sm:$0xff]
    %v234 = vld [vmem:[#allocation8 + $0x128] sm:$0xff]
    %v235 = vld [vmem:[#allocation8 + $0x130] sm:$0xff]
    %v236 = vld [vmem:[#allocation8 + $0x138] sm:$0xff]
    %v237 = vld [vmem:[#allocation8 + $0x140] sm:$0xff]
    %v238 = vld [vmem:[#allocation8 + $0x148] sm:$0xff]
    %v239 = vld [vmem:[#allocation8 + $0x150] sm:$0xff]
    %v240 = vld [vmem:[#allocation8 + $0x158] sm:$0xff]
    %v241 = vld [vmem:[#allocation8 + $0x160] sm:$0xff]
    %v242 = vld [vmem:[#allocation8 + $0x168] sm:$0xff]
    %v243 = vld [vmem:[#allocation8 + $0x170] sm:$0xff]
    %v244 = vld [vmem:[#allocation8 + $0x178] sm:$0xff]
    %v245 = vld [vmem:[#allocation8 + $0x180] sm:$0xff]
    %v246 = vld [vmem:[#allocation8 + $0x188] sm:$0xff]
    %v247 = vld [vmem:[#allocation8 + $0x190] sm:$0xff]
    %v248 = vld [vmem:[#allocation8 + $0x198] sm:$0xff]
    %v249 = vld [vmem:[#allocation8 + $0x1a0] sm:$0xff]
    %v250 = vld [vmem:[#allocation8 + $0x1a8] sm:$0xff]
    %v251 = vld [vmem:[#allocation8 + $0x1b0] sm:$0xff]
    %v252 = vld [vmem:[#allocation8 + $0x1b8] sm:$0xff]
    %v253 = vld [vmem:[#allocation8 + $0x1c0] sm:$0xff]
    %v254 = vld [vmem:[#allocation8 + $0x1c8] sm:$0xff]
    %v255 = vld [vmem:[#allocation8 + $0x1d0] sm:$0xff]
    %v256 = vld [vmem:[#allocation8 + $0x1d8] sm:$0xff]
    %v257 = vld [vmem:[#allocation8 + $0x1e0] sm:$0xff]
    %v258 = vld [vmem:[#allocation8 + $0x1e8] sm:$0xff]
    %v259 = vld [vmem:[#allocation8 + $0x1f0] sm:$0xff]
    %v260 = vld [vmem:[#allocation8 + $0x1f8] sm:$0xff]
    %v261 = vld [vmem:[%s6] sm:$0x1]
    %v262 = vld [vmem:[%s7] sm:$0x1]
    %263 = vmatpush.msra.mxu0 %v257
    %264 = vmatpush.msra.mxu0 %v253
    %265 = vmatpush.msra.mxu0 %v249
    %266 = vmatpush.msra.mxu0 %v245
    %267 = vmatpush.msra.mxu0 %v241
    %268 = vmatpush.msra.mxu0 %v237
    %269 = vmatpush.msra.mxu0 %v233
    %270 = vmatpush.msra.mxu0 %v229
    %271 = vmatpush.msra.mxu0 %v225
    %272 = vmatpush.msra.mxu0 %v221
    %273 = vmatpush.msra.mxu0 %v217
    %274 = vmatpush.msra.mxu0 %v213
    %275 = vmatpush.msra.mxu0 %v209
    %276 = vmatpush.msra.mxu0 %v205
    %277 = vmatpush.msra.mxu0 %v201
    %278 = vmatpush.msra.mxu0 %v197
    %279 = vmatmul.f32.gmra.mxu0 %v261
    %v280 = vpop.f32.mrf.mxu0
    %v281 = vadd.f32 0.0, %v280
    %282 = vdwg.mxu0
    %283 = vmatpush.msra.mxu0 %v258
    %284 = vmatpush.msra.mxu0 %v254
    %285 = vmatpush.msra.mxu0 %v250
    %286 = vmatpush.msra.mxu0 %v246
    %287 = vmatpush.msra.mxu0 %v242
    %288 = vmatpush.msra.mxu0 %v238
    %289 = vmatpush.msra.mxu0 %v234
    %290 = vmatpush.msra.mxu0 %v230
    %291 = vmatpush.msra.mxu0 %v226
    %292 = vmatpush.msra.mxu0 %v222
    %293 = vmatpush.msra.mxu0 %v218
    %294 = vmatpush.msra.mxu0 %v214
    %295 = vmatpush.msra.mxu0 %v210
    %296 = vmatpush.msra.mxu0 %v206
    %297 = vmatpush.msra.mxu0 %v202
    %298 = vmatpush.msra.mxu0 %v198
    %299 = vmatmul.f32.gmra.mxu0 %v261
    %v300 = vpop.f32.mrf.mxu0
    %v301 = vadd.f32 0.0, %v300
    %302 = vdwg.mxu0
    %303 = vmatpush.msra.mxu0 %v259
    %304 = vmatpush.msra.mxu0 %v255
    %305 = vmatpush.msra.mxu0 %v251
    %306 = vmatpush.msra.mxu0 %v247
    %307 = vmatpush.msra.mxu0 %v243
    %308 = vmatpush.msra.mxu0 %v239
    %309 = vmatpush.msra.mxu0 %v235
    %310 = vmatpush.msra.mxu0 %v231
    %311 = vmatpush.msra.mxu0 %v227
    %312 = vmatpush.msra.mxu0 %v223
    %313 = vmatpush.msra.mxu0 %v219
    %314 = vmatpush.msra.mxu0 %v215
    %315 = vmatpush.msra.mxu0 %v211
    %316 = vmatpush.msra.mxu0 %v207
    %317 = vmatpush.msra.mxu0 %v203
    %318 = vmatpush.msra.mxu0 %v199
    %319 = vmatmul.f32.gmra.mxu0 %v261
    %v320 = vpop.f32.mrf.mxu0
    %v321 = vadd.f32 0.0, %v320
    %322 = vdwg.mxu0
    %323 = vmatpush.msra.mxu0 %v260
    %324 = vmatpush.msra.mxu0 %v256
    %325 = vmatpush.msra.mxu0 %v252
    %326 = vmatpush.msra.mxu0 %v248
    %327 = vmatpush.msra.mxu0 %v244
    %328 = vmatpush.msra.mxu0 %v240
    %329 = vmatpush.msra.mxu0 %v236
    %330 = vmatpush.msra.mxu0 %v232
    %331 = vmatpush.msra.mxu0 %v228
    %332 = vmatpush.msra.mxu0 %v224
    %333 = vmatpush.msra.mxu0 %v220
    %334 = vmatpush.msra.mxu0 %v216
    %335 = vmatpush.msra.mxu0 %v212
    %336 = vmatpush.msra.mxu0 %v208
    %337 = vmatpush.msra.mxu0 %v204
    %338 = vmatpush.msra.mxu0 %v200
    %339 = vmatmul.f32.gmra.mxu0 %v261
    %v340 = vpop.f32.mrf.mxu0
    %v341 = vadd.f32 0.0, %v340
    %342 = vdwg.mxu0
    %v343 = vadd.f32 %v135, %v281
    %v344 = vadd.f32 %v155, %v301
    %v345 = vadd.f32 %v175, %v321
    %v346 = vadd.f32 %v195, %v341
    %v347 = vxor.u32 %v343, 2147483648
    %v348 = vmul.f32 %v347, 1.442695
    %v349 = vpow.pop %v348
    %v350 = vadd.f32 %v349, 1.0
    %v351 = vrcp.pop %v350
    %v352 = vmul.f32 %v350, %v351
    %v353 = vsub.f32 1.0, %v352
    %v354 = vmul.f32 %v351, %v353
    %v355 = vadd.f32 %v351, %v354
    %vm356 = vweird.f32 %v350
    %vm357 = vweird.f32 %v351
    %vm358 = vmor %vm356, %vm357
    %v359 = vsel %vm358, %v351, %v355
    %v360 = vand.u32 2147483647, %v350
    %vm361 = vcmp.eq.f32.partialorder %v360, 8.507059e+37
    %v362 = vand.u32 %v350, 2147483648
    %v363 = vor.u32 1.1754944e-38, %v362
    %v364 = vsel %vm361, %v363, %v359
    %v365 = vmul.f32 1.0, %v364
    %v366 = vxor.u32 %v344, 2147483648
    %v367 = vmul.f32 %v366, 1.442695
    %v368 = vpow.pop %v367
    %v369 = vadd.f32 %v368, 1.0
    %v370 = vrcp.pop %v369
    %v371 = vmul.f32 %v369, %v370
    %v372 = vsub.f32 1.0, %v371
    %v373 = vmul.f32 %v370, %v372
    %v374 = vadd.f32 %v370, %v373
    %vm375 = vweird.f32 %v369
    %vm376 = vweird.f32 %v370
    %vm377 = vmor %vm375, %vm376
    %v378 = vsel %vm377, %v370, %v374
    %v379 = vand.u32 2147483647, %v369
    %vm380 = vcmp.eq.f32.partialorder %v379, 8.507059e+37
    %v381 = vand.u32 %v369, 2147483648
    %v382 = vor.u32 1.1754944e-38, %v381
    %v383 = vsel %vm380, %v382, %v378
    %v384 = vmul.f32 1.0, %v383
    %v385 = vtanh.pop %v345
    %v386 = vxor.u32 %v346, 2147483648
    %v387 = vmul.f32 %v386, 1.442695
    %v388 = vpow.pop %v387
    %v389 = vadd.f32 %v388, 1.0
    %v390 = vrcp.pop %v389
    %v391 = vmul.f32 %v389, %v390
    %v392 = vsub.f32 1.0, %v391
    %v393 = vmul.f32 %v390, %v392
    %v394 = vadd.f32 %v390, %v393
    %vm395 = vweird.f32 %v389
    %vm396 = vweird.f32 %v390
    %vm397 = vmor %vm395, %vm396
    %v398 = vsel %vm397, %v390, %v394
    %v399 = vand.u32 2147483647, %v389
    %vm400 = vcmp.eq.f32.partialorder %v399, 8.507059e+37
    %v401 = vand.u32 %v389, 2147483648
    %v402 = vor.u32 1.1754944e-38, %v401
    %v403 = vsel %vm400, %v402, %v398
    %v404 = vmul.f32 1.0, %v403
    %v405 = vmul.f32 %v384, %v262
    %v406 = vmul.f32 %v365, %v385
    %v407 = vadd.f32 %v405, %v406
    %v408 = vtanh.pop %v407
    %v409 = vmul.f32 %v404, %v408
    %410 = vmatpush.msra.mxu0 %v257
    %411 = vmatpush.msra.mxu0 %v253
    %412 = vmatpush.msra.mxu0 %v249
    %413 = vmatpush.msra.mxu0 %v245
    %414 = vmatpush.msra.mxu0 %v241
    %415 = vmatpush.msra.mxu0 %v237
    %416 = vmatpush.msra.mxu0 %v233
    %417 = vmatpush.msra.mxu0 %v229
    %418 = vmatpush.msra.mxu0 %v225
    %419 = vmatpush.msra.mxu0 %v221
    %420 = vmatpush.msra.mxu0 %v217
    %421 = vmatpush.msra.mxu0 %v213
    %422 = vmatpush.msra.mxu0 %v209
    %423 = vmatpush.msra.mxu0 %v205
    %424 = vmatpush.msra.mxu0 %v201
    %425 = vmatpush.msra.mxu0 %v197
    %426 = vmatmul.f32.gmra.mxu0 %v409
    %v427 = vpop.f32.mrf.mxu0
    %v428 = vadd.f32 0.0, %v427
    %429 = vdwg.mxu0
    %430 = vmatpush.msra.mxu0 %v258
    %431 = vmatpush.msra.mxu0 %v254
    %432 = vmatpush.msra.mxu0 %v250
    %433 = vmatpush.msra.mxu0 %v246
    %434 = vmatpush.msra.mxu0 %v242
    %435 = vmatpush.msra.mxu0 %v238
    %436 = vmatpush.msra.mxu0 %v234
    %437 = vmatpush.msra.mxu0 %v230
    %438 = vmatpush.msra.mxu0 %v226
    %439 = vmatpush.msra.mxu0 %v222
    %440 = vmatpush.msra.mxu0 %v218
    %441 = vmatpush.msra.mxu0 %v214
    %442 = vmatpush.msra.mxu0 %v210
    %443 = vmatpush.msra.mxu0 %v206
    %444 = vmatpush.msra.mxu0 %v202
    %445 = vmatpush.msra.mxu0 %v198
    %446 = vmatmul.f32.gmra.mxu0 %v409
    %v447 = vpop.f32.mrf.mxu0
    %v448 = vadd.f32 0.0, %v447
    %449 = vdwg.mxu0
    %450 = vmatpush.msra.mxu0 %v259
    %451 = vmatpush.msra.mxu0 %v255
    %452 = vmatpush.msra.mxu0 %v251
    %453 = vmatpush.msra.mxu0 %v247
    %454 = vmatpush.msra.mxu0 %v243
    %455 = vmatpush.msra.mxu0 %v239
    %456 = vmatpush.msra.mxu0 %v235
    %457 = vmatpush.msra.mxu0 %v231
    %458 = vmatpush.msra.mxu0 %v227
    %459 = vmatpush.msra.mxu0 %v223
    %460 = vmatpush.msra.mxu0 %v219
    %461 = vmatpush.msra.mxu0 %v215
    %462 = vmatpush.msra.mxu0 %v211
    %463 = vmatpush.msra.mxu0 %v207
    %464 = vmatpush.msra.mxu0 %v203
    %465 = vmatpush.msra.mxu0 %v199
    %466 = vmatmul.f32.gmra.mxu0 %v409
    %v467 = vpop.f32.mrf.mxu0
    %v468 = vadd.f32 0.0, %v467
    %469 = vdwg.mxu0
    %470 = vmatpush.msra.mxu0 %v260
    %471 = vmatpush.msra.mxu0 %v256
    %472 = vmatpush.msra.mxu0 %v252
    %473 = vmatpush.msra.mxu0 %v248
    %474 = vmatpush.msra.mxu0 %v244
    %475 = vmatpush.msra.mxu0 %v240
    %476 = vmatpush.msra.mxu0 %v236
    %477 = vmatpush.msra.mxu0 %v232
    %478 = vmatpush.msra.mxu0 %v228
    %479 = vmatpush.msra.mxu0 %v224
    %480 = vmatpush.msra.mxu0 %v220
    %481 = vmatpush.msra.mxu0 %v216
    %482 = vmatpush.msra.mxu0 %v212
    %483 = vmatpush.msra.mxu0 %v208
    %484 = vmatpush.msra.mxu0 %v204
    %485 = vmatpush.msra.mxu0 %v200
    %486 = vmatmul.f32.gmra.mxu0 %v409
    %v487 = vpop.f32.mrf.mxu0
    %v488 = vadd.f32 0.0, %v487
    %489 = vdwg.mxu0
    %v494 = vrot.slane %v428, 7
    %v495 = vrot.slane %v448, 7
    %v496 = vrot.slane %v468, 7
    %v497 = vrot.slane %v488, 7
    %v502 = vadd.f32 %v135, %v494
    %v503 = vadd.f32 %v155, %v495
    %v504 = vadd.f32 %v175, %v496
    %v505 = vadd.f32 %v195, %v497
    %v506 = vxor.u32 %v502, 2147483648
    %v507 = vmul.f32 %v506, 1.442695
    %v508 = vpow.pop %v507
    %v509 = vadd.f32 %v508, 1.0
    %v510 = vrcp.pop %v509
    %v511 = vmul.f32 %v509, %v510
    %v512 = vsub.f32 1.0, %v511
    %v513 = vmul.f32 %v510, %v512
    %v514 = vadd.f32 %v510, %v513
    %vm515 = vweird.f32 %v509
    %vm516 = vweird.f32 %v510
    %vm517 = vmor %vm515, %vm516
    %v518 = vsel %vm517, %v510, %v514
    %v519 = vand.u32 2147483647, %v509
    %vm520 = vcmp.eq.f32.partialorder %v519, 8.507059e+37
    %v521 = vand.u32 %v509, 2147483648
    %v522 = vor.u32 1.1754944e-38, %v521
    %v523 = vsel %vm520, %v522, %v518
    %v524 = vmul.f32 1.0, %v523
    %v525 = vxor.u32 %v503, 2147483648
    %v526 = vmul.f32 %v525, 1.442695
    %v527 = vpow.pop %v526
    %v528 = vadd.f32 %v527, 1.0
    %v529 = vrcp.pop %v528
    %v530 = vmul.f32 %v528, %v529
    %v531 = vsub.f32 1.0, %v530
    %v532 = vmul.f32 %v529, %v531
    %v533 = vadd.f32 %v529, %v532
    %vm534 = vweird.f32 %v528
    %vm535 = vweird.f32 %v529
    %vm536 = vmor %vm534, %vm535
    %v537 = vsel %vm536, %v529, %v533
    %v538 = vand.u32 2147483647, %v528
    %vm539 = vcmp.eq.f32.partialorder %v538, 8.507059e+37
    %v540 = vand.u32 %v528, 2147483648
    %v541 = vor.u32 1.1754944e-38, %v540
    %v542 = vsel %vm539, %v541, %v537
    %v543 = vmul.f32 1.0, %v542
    %v544 = vtanh.pop %v504
    %v545 = vxor.u32 %v505, 2147483648
    %v546 = vmul.f32 %v545, 1.442695
    %v547 = vpow.pop %v546
    %v548 = vadd.f32 %v547, 1.0
    %v549 = vrcp.pop %v548
    %v550 = vmul.f32 %v548, %v549
    %v551 = vsub.f32 1.0, %v550
    %v552 = vmul.f32 %v549, %v551
    %v553 = vadd.f32 %v549, %v552
    %vm554 = vweird.f32 %v548
    %vm555 = vweird.f32 %v549
    %vm556 = vmor %vm554, %vm555
    %v557 = vsel %vm556, %v549, %v553
    %v558 = vand.u32 2147483647, %v548
    %vm559 = vcmp.eq.f32.partialorder %v558, 8.507059e+37
    %v560 = vand.u32 %v548, 2147483648
    %v561 = vor.u32 1.1754944e-38, %v560
    %v562 = vsel %vm559, %v561, %v557
    %v563 = vmul.f32 1.0, %v562
    %v565 = vrot.slane %v407, 7
    %v567 = vmul.f32 %v543, %v565
    %v568 = vmul.f32 %v524, %v544
    %v569 = vadd.f32 %v567, %v568
    %v570 = vtanh.pop %v569
    %v571 = vmul.f32 %v563, %v570
    %v573 = vrot.slane %v571, 1
    %575 = vmatpush.msra.mxu0 %v257
    %576 = vmatpush.msra.mxu0 %v253
    %577 = vmatpush.msra.mxu0 %v249
    %578 = vmatpush.msra.mxu0 %v245
    %579 = vmatpush.msra.mxu0 %v241
    %580 = vmatpush.msra.mxu0 %v237
    %581 = vmatpush.msra.mxu0 %v233
    %582 = vmatpush.msra.mxu0 %v229
    %583 = vmatpush.msra.mxu0 %v225
    %584 = vmatpush.msra.mxu0 %v221
    %585 = vmatpush.msra.mxu0 %v217
    %586 = vmatpush.msra.mxu0 %v213
    %587 = vmatpush.msra.mxu0 %v209
    %588 = vmatpush.msra.mxu0 %v205
    %589 = vmatpush.msra.mxu0 %v201
    %590 = vmatpush.msra.mxu0 %v197
    %591 = vmatmul.f32.gmra.mxu0 %v573
    %v592 = vpop.f32.mrf.mxu0
    %v593 = vadd.f32 0.0, %v592
    %594 = vdwg.mxu0
    %595 = vmatpush.msra.mxu0 %v258
    %596 = vmatpush.msra.mxu0 %v254
    %597 = vmatpush.msra.mxu0 %v250
    %598 = vmatpush.msra.mxu0 %v246
    %599 = vmatpush.msra.mxu0 %v242
    %600 = vmatpush.msra.mxu0 %v238
    %601 = vmatpush.msra.mxu0 %v234
    %602 = vmatpush.msra.mxu0 %v230
    %603 = vmatpush.msra.mxu0 %v226
    %604 = vmatpush.msra.mxu0 %v222
    %605 = vmatpush.msra.mxu0 %v218
    %606 = vmatpush.msra.mxu0 %v214
    %607 = vmatpush.msra.mxu0 %v210
    %608 = vmatpush.msra.mxu0 %v206
    %609 = vmatpush.msra.mxu0 %v202
    %610 = vmatpush.msra.mxu0 %v198
    %611 = vmatmul.f32.gmra.mxu0 %v573
    %v612 = vpop.f32.mrf.mxu0
    %v613 = vadd.f32 0.0, %v612
    %614 = vdwg.mxu0
    %615 = vmatpush.msra.mxu0 %v259
    %616 = vmatpush.msra.mxu0 %v255
    %617 = vmatpush.msra.mxu0 %v251
    %618 = vmatpush.msra.mxu0 %v247
    %619 = vmatpush.msra.mxu0 %v243
    %620 = vmatpush.msra.mxu0 %v239
    %621 = vmatpush.msra.mxu0 %v235
    %622 = vmatpush.msra.mxu0 %v231
    %623 = vmatpush.msra.mxu0 %v227
    %624 = vmatpush.msra.mxu0 %v223
    %625 = vmatpush.msra.mxu0 %v219
    %626 = vmatpush.msra.mxu0 %v215
    %627 = vmatpush.msra.mxu0 %v211
    %628 = vmatpush.msra.mxu0 %v207
    %629 = vmatpush.msra.mxu0 %v203
    %630 = vmatpush.msra.mxu0 %v199
    %631 = vmatmul.f32.gmra.mxu0 %v573
    %v632 = vpop.f32.mrf.mxu0
    %v633 = vadd.f32 0.0, %v632
    %634 = vdwg.mxu0
    %635 = vmatpush.msra.mxu0 %v260
    %636 = vmatpush.msra.mxu0 %v256
    %637 = vmatpush.msra.mxu0 %v252
    %638 = vmatpush.msra.mxu0 %v248
    %639 = vmatpush.msra.mxu0 %v244
    %640 = vmatpush.msra.mxu0 %v240
    %641 = vmatpush.msra.mxu0 %v236
    %642 = vmatpush.msra.mxu0 %v232
    %643 = vmatpush.msra.mxu0 %v228
    %644 = vmatpush.msra.mxu0 %v224
    %645 = vmatpush.msra.mxu0 %v220
    %646 = vmatpush.msra.mxu0 %v216
    %647 = vmatpush.msra.mxu0 %v212
    %648 = vmatpush.msra.mxu0 %v208
    %649 = vmatpush.msra.mxu0 %v204
    %650 = vmatpush.msra.mxu0 %v200
    %651 = vmatmul.f32.gmra.mxu0 %v573
    %v652 = vpop.f32.mrf.mxu0
    %v653 = vadd.f32 0.0, %v652
    %654 = vdwg.mxu0
    %v659 = vrot.slane %v593, 6
    %v660 = vrot.slane %v613, 6
    %v661 = vrot.slane %v633, 6
    %v662 = vrot.slane %v653, 6
    %v667 = vadd.f32 %v135, %v659
    %v668 = vadd.f32 %v155, %v660
    %v669 = vadd.f32 %v175, %v661
    %v670 = vadd.f32 %v195, %v662
    %v671 = vxor.u32 %v667, 2147483648
    %v672 = vmul.f32 %v671, 1.442695
    %v673 = vpow.pop %v672
    %v674 = vadd.f32 %v673, 1.0
    %v675 = vrcp.pop %v674
    %v676 = vmul.f32 %v674, %v675
    %v677 = vsub.f32 1.0, %v676
    %v678 = vmul.f32 %v675, %v677
    %v679 = vadd.f32 %v675, %v678
    %vm680 = vweird.f32 %v674
    %vm681 = vweird.f32 %v675
    %vm682 = vmor %vm680, %vm681
    %v683 = vsel %vm682, %v675, %v679
    %v684 = vand.u32 2147483647, %v674
    %vm685 = vcmp.eq.f32.partialorder %v684, 8.507059e+37
    %v686 = vand.u32 %v674, 2147483648
    %v687 = vor.u32 1.1754944e-38, %v686
    %v688 = vsel %vm685, %v687, %v683
    %v689 = vmul.f32 1.0, %v688
    %v690 = vxor.u32 %v668, 2147483648
    %v691 = vmul.f32 %v690, 1.442695
    %v692 = vpow.pop %v691
    %v693 = vadd.f32 %v692, 1.0
    %v694 = vrcp.pop %v693
    %v695 = vmul.f32 %v693, %v694
    %v696 = vsub.f32 1.0, %v695
    %v697 = vmul.f32 %v694, %v696
    %v698 = vadd.f32 %v694, %v697
    %vm699 = vweird.f32 %v693
    %vm700 = vweird.f32 %v694
    %vm701 = vmor %vm699, %vm700
    %v702 = vsel %vm701, %v694, %v698
    %v703 = vand.u32 2147483647, %v693
    %vm704 = vcmp.eq.f32.partialorder %v703, 8.507059e+37
    %v705 = vand.u32 %v693, 2147483648
    %v706 = vor.u32 1.1754944e-38, %v705
    %v707 = vsel %vm704, %v706, %v702
    %v708 = vmul.f32 1.0, %v707
    %v709 = vtanh.pop %v669
    %v710 = vxor.u32 %v670, 2147483648
    %v711 = vmul.f32 %v710, 1.442695
    %v712 = vpow.pop %v711
    %v713 = vadd.f32 %v712, 1.0
    %v714 = vrcp.pop %v713
    %v715 = vmul.f32 %v713, %v714
    %v716 = vsub.f32 1.0, %v715
    %v717 = vmul.f32 %v714, %v716
    %v718 = vadd.f32 %v714, %v717
    %vm719 = vweird.f32 %v713
    %vm720 = vweird.f32 %v714
    %vm721 = vmor %vm719, %vm720
    %v722 = vsel %vm721, %v714, %v718
    %v723 = vand.u32 2147483647, %v713
    %vm724 = vcmp.eq.f32.partialorder %v723, 8.507059e+37
    %v725 = vand.u32 %v713, 2147483648
    %v726 = vor.u32 1.1754944e-38, %v725
    %v727 = vsel %vm724, %v726, %v722
    %v728 = vmul.f32 1.0, %v727
    %v730 = vrot.slane %v569, 7
    %v732 = vmul.f32 %v708, %v730
    %v733 = vmul.f32 %v689, %v709
    %v734 = vadd.f32 %v732, %v733
    %v735 = vtanh.pop %v734
    %v736 = vmul.f32 %v728, %v735
    %v738 = vrot.slane %v736, 2
    %740 = vmatpush.msra.mxu0 %v257
    %741 = vmatpush.msra.mxu0 %v253
    %742 = vmatpush.msra.mxu0 %v249
    %743 = vmatpush.msra.mxu0 %v245
    %744 = vmatpush.msra.mxu0 %v241
    %745 = vmatpush.msra.mxu0 %v237
    %746 = vmatpush.msra.mxu0 %v233
    %747 = vmatpush.msra.mxu0 %v229
    %748 = vmatpush.msra.mxu0 %v225
    %749 = vmatpush.msra.mxu0 %v221
    %750 = vmatpush.msra.mxu0 %v217
    %751 = vmatpush.msra.mxu0 %v213
    %752 = vmatpush.msra.mxu0 %v209
    %753 = vmatpush.msra.mxu0 %v205
    %754 = vmatpush.msra.mxu0 %v201
    %755 = vmatpush.msra.mxu0 %v197
    %756 = vmatmul.f32.gmra.mxu0 %v738
    %v757 = vpop.f32.mrf.mxu0
    %v758 = vadd.f32 0.0, %v757
    %759 = vdwg.mxu0
    %760 = vmatpush.msra.mxu0 %v258
    %761 = vmatpush.msra.mxu0 %v254
    %762 = vmatpush.msra.mxu0 %v250
    %763 = vmatpush.msra.mxu0 %v246
    %764 = vmatpush.msra.mxu0 %v242
    %765 = vmatpush.msra.mxu0 %v238
    %766 = vmatpush.msra.mxu0 %v234
    %767 = vmatpush.msra.mxu0 %v230
    %768 = vmatpush.msra.mxu0 %v226
    %769 = vmatpush.msra.mxu0 %v222
    %770 = vmatpush.msra.mxu0 %v218
    %771 = vmatpush.msra.mxu0 %v214
    %772 = vmatpush.msra.mxu0 %v210
    %773 = vmatpush.msra.mxu0 %v206
    %774 = vmatpush.msra.mxu0 %v202
    %775 = vmatpush.msra.mxu0 %v198
    %776 = vmatmul.f32.gmra.mxu0 %v738
    %v777 = vpop.f32.mrf.mxu0
    %v778 = vadd.f32 0.0, %v777
    %779 = vdwg.mxu0
    %780 = vmatpush.msra.mxu0 %v259
    %781 = vmatpush.msra.mxu0 %v255
    %782 = vmatpush.msra.mxu0 %v251
    %783 = vmatpush.msra.mxu0 %v247
    %784 = vmatpush.msra.mxu0 %v243
    %785 = vmatpush.msra.mxu0 %v239
    %786 = vmatpush.msra.mxu0 %v235
    %787 = vmatpush.msra.mxu0 %v231
    %788 = vmatpush.msra.mxu0 %v227
    %789 = vmatpush.msra.mxu0 %v223
    %790 = vmatpush.msra.mxu0 %v219
    %791 = vmatpush.msra.mxu0 %v215
    %792 = vmatpush.msra.mxu0 %v211
    %793 = vmatpush.msra.mxu0 %v207
    %794 = vmatpush.msra.mxu0 %v203
    %795 = vmatpush.msra.mxu0 %v199
    %796 = vmatmul.f32.gmra.mxu0 %v738
    %v797 = vpop.f32.mrf.mxu0
    %v798 = vadd.f32 0.0, %v797
    %799 = vdwg.mxu0
    %800 = vmatpush.msra.mxu0 %v260
    %801 = vmatpush.msra.mxu0 %v256
    %802 = vmatpush.msra.mxu0 %v252
    %803 = vmatpush.msra.mxu0 %v248
    %804 = vmatpush.msra.mxu0 %v244
    %805 = vmatpush.msra.mxu0 %v240
    %806 = vmatpush.msra.mxu0 %v236
    %807 = vmatpush.msra.mxu0 %v232
    %808 = vmatpush.msra.mxu0 %v228
    %809 = vmatpush.msra.mxu0 %v224
    %810 = vmatpush.msra.mxu0 %v220
    %811 = vmatpush.msra.mxu0 %v216
    %812 = vmatpush.msra.mxu0 %v212
    %813 = vmatpush.msra.mxu0 %v208
    %814 = vmatpush.msra.mxu0 %v204
    %815 = vmatpush.msra.mxu0 %v200
    %816 = vmatmul.f32.gmra.mxu0 %v738
    %v817 = vpop.f32.mrf.mxu0
    %v818 = vadd.f32 0.0, %v817
    %819 = vdwg.mxu0
    %v824 = vrot.slane %v758, 5
    %v825 = vrot.slane %v778, 5
    %v826 = vrot.slane %v798, 5
    %v827 = vrot.slane %v818, 5
    %v832 = vadd.f32 %v135, %v824
    %v833 = vadd.f32 %v155, %v825
    %v834 = vadd.f32 %v175, %v826
    %v835 = vadd.f32 %v195, %v827
    %v836 = vxor.u32 %v832, 2147483648
    %v837 = vmul.f32 %v836, 1.442695
    %v838 = vpow.pop %v837
    %v839 = vadd.f32 %v838, 1.0
    %v840 = vrcp.pop %v839
    %v841 = vmul.f32 %v839, %v840
    %v842 = vsub.f32 1.0, %v841
    %v843 = vmul.f32 %v840, %v842
    %v844 = vadd.f32 %v840, %v843
    %vm845 = vweird.f32 %v839
    %vm846 = vweird.f32 %v840
    %vm847 = vmor %vm845, %vm846
    %v848 = vsel %vm847, %v840, %v844
    %v849 = vand.u32 2147483647, %v839
    %vm850 = vcmp.eq.f32.partialorder %v849, 8.507059e+37
    %v851 = vand.u32 %v839, 2147483648
    %v852 = vor.u32 1.1754944e-38, %v851
    %v853 = vsel %vm850, %v852, %v848
    %v854 = vmul.f32 1.0, %v853
    %v855 = vxor.u32 %v833, 2147483648
    %v856 = vmul.f32 %v855, 1.442695
    %v857 = vpow.pop %v856
    %v858 = vadd.f32 %v857, 1.0
    %v859 = vrcp.pop %v858
    %v860 = vmul.f32 %v858, %v859
    %v861 = vsub.f32 1.0, %v860
    %v862 = vmul.f32 %v859, %v861
    %v863 = vadd.f32 %v859, %v862
    %vm864 = vweird.f32 %v858
    %vm865 = vweird.f32 %v859
    %vm866 = vmor %vm864, %vm865
    %v867 = vsel %vm866, %v859, %v863
    %v868 = vand.u32 2147483647, %v858
    %vm869 = vcmp.eq.f32.partialorder %v868, 8.507059e+37
    %v870 = vand.u32 %v858, 2147483648
    %v871 = vor.u32 1.1754944e-38, %v870
    %v872 = vsel %vm869, %v871, %v867
    %v873 = vmul.f32 1.0, %v872
    %v874 = vtanh.pop %v834
    %v875 = vxor.u32 %v835, 2147483648
    %v876 = vmul.f32 %v875, 1.442695
    %v877 = vpow.pop %v876
    %v878 = vadd.f32 %v877, 1.0
    %v879 = vrcp.pop %v878
    %v880 = vmul.f32 %v878, %v879
    %v881 = vsub.f32 1.0, %v880
    %v882 = vmul.f32 %v879, %v881
    %v883 = vadd.f32 %v879, %v882
    %vm884 = vweird.f32 %v878
    %vm885 = vweird.f32 %v879
    %vm886 = vmor %vm884, %vm885
    %v887 = vsel %vm886, %v879, %v883
    %v888 = vand.u32 2147483647, %v878
    %vm889 = vcmp.eq.f32.partialorder %v888, 8.507059e+37
    %v890 = vand.u32 %v878, 2147483648
    %v891 = vor.u32 1.1754944e-38, %v890
    %v892 = vsel %vm889, %v891, %v887
    %v893 = vmul.f32 1.0, %v892
    %v895 = vrot.slane %v734, 7
    %v897 = vmul.f32 %v873, %v895
    %v898 = vmul.f32 %v854, %v874
    %v899 = vadd.f32 %v897, %v898
    %v900 = vtanh.pop %v899
    %v901 = vmul.f32 %v893, %v900
    %v903 = vrot.slane %v901, 3
    %905 = vmatpush.msra.mxu0 %v257
    %906 = vmatpush.msra.mxu0 %v253
    %907 = vmatpush.msra.mxu0 %v249
    %908 = vmatpush.msra.mxu0 %v245
    %909 = vmatpush.msra.mxu0 %v241
    %910 = vmatpush.msra.mxu0 %v237
    %911 = vmatpush.msra.mxu0 %v233
    %912 = vmatpush.msra.mxu0 %v229
    %913 = vmatpush.msra.mxu0 %v225
    %914 = vmatpush.msra.mxu0 %v221
    %915 = vmatpush.msra.mxu0 %v217
    %916 = vmatpush.msra.mxu0 %v213
    %917 = vmatpush.msra.mxu0 %v209
    %918 = vmatpush.msra.mxu0 %v205
    %919 = vmatpush.msra.mxu0 %v201
    %920 = vmatpush.msra.mxu0 %v197
    %921 = vmatmul.f32.gmra.mxu0 %v903
    %v922 = vpop.f32.mrf.mxu0
    %v923 = vadd.f32 0.0, %v922
    %924 = vdwg.mxu0
    %925 = vmatpush.msra.mxu0 %v258
    %926 = vmatpush.msra.mxu0 %v254
    %927 = vmatpush.msra.mxu0 %v250
    %928 = vmatpush.msra.mxu0 %v246
    %929 = vmatpush.msra.mxu0 %v242
    %930 = vmatpush.msra.mxu0 %v238
    %931 = vmatpush.msra.mxu0 %v234
    %932 = vmatpush.msra.mxu0 %v230
    %933 = vmatpush.msra.mxu0 %v226
    %934 = vmatpush.msra.mxu0 %v222
    %935 = vmatpush.msra.mxu0 %v218
    %936 = vmatpush.msra.mxu0 %v214
    %937 = vmatpush.msra.mxu0 %v210
    %938 = vmatpush.msra.mxu0 %v206
    %939 = vmatpush.msra.mxu0 %v202
    %940 = vmatpush.msra.mxu0 %v198
    %941 = vmatmul.f32.gmra.mxu0 %v903
    %v942 = vpop.f32.mrf.mxu0
    %v943 = vadd.f32 0.0, %v942
    %944 = vdwg.mxu0
    %945 = vmatpush.msra.mxu0 %v259
    %946 = vmatpush.msra.mxu0 %v255
    %947 = vmatpush.msra.mxu0 %v251
    %948 = vmatpush.msra.mxu0 %v247
    %949 = vmatpush.msra.mxu0 %v243
    %950 = vmatpush.msra.mxu0 %v239
    %951 = vmatpush.msra.mxu0 %v235
    %952 = vmatpush.msra.mxu0 %v231
    %953 = vmatpush.msra.mxu0 %v227
    %954 = vmatpush.msra.mxu0 %v223
    %955 = vmatpush.msra.mxu0 %v219
    %956 = vmatpush.msra.mxu0 %v215
    %957 = vmatpush.msra.mxu0 %v211
    %958 = vmatpush.msra.mxu0 %v207
    %959 = vmatpush.msra.mxu0 %v203
    %960 = vmatpush.msra.mxu0 %v199
    %961 = vmatmul.f32.gmra.mxu0 %v903
    %v962 = vpop.f32.mrf.mxu0
    %v963 = vadd.f32 0.0, %v962
    %964 = vdwg.mxu0
    %965 = vmatpush.msra.mxu0 %v260
    %966 = vmatpush.msra.mxu0 %v256
    %967 = vmatpush.msra.mxu0 %v252
    %968 = vmatpush.msra.mxu0 %v248
    %969 = vmatpush.msra.mxu0 %v244
    %970 = vmatpush.msra.mxu0 %v240
    %971 = vmatpush.msra.mxu0 %v236
    %972 = vmatpush.msra.mxu0 %v232
    %973 = vmatpush.msra.mxu0 %v228
    %974 = vmatpush.msra.mxu0 %v224
    %975 = vmatpush.msra.mxu0 %v220
    %976 = vmatpush.msra.mxu0 %v216
    %977 = vmatpush.msra.mxu0 %v212
    %978 = vmatpush.msra.mxu0 %v208
    %979 = vmatpush.msra.mxu0 %v204
    %980 = vmatpush.msra.mxu0 %v200
    %981 = vmatmul.f32.gmra.mxu0 %v903
    %v982 = vpop.f32.mrf.mxu0
    %v983 = vadd.f32 0.0, %v982
    %984 = vdwg.mxu0
    %v989 = vrot.slane %v923, 4
    %v990 = vrot.slane %v943, 4
    %v991 = vrot.slane %v963, 4
    %v992 = vrot.slane %v983, 4
    %v997 = vadd.f32 %v135, %v989
    %v998 = vadd.f32 %v155, %v990
    %v999 = vadd.f32 %v175, %v991
    %v1000 = vadd.f32 %v195, %v992
    %v1001 = vxor.u32 %v997, 2147483648
    %v1002 = vmul.f32 %v1001, 1.442695
    %v1003 = vpow.pop %v1002
    %v1004 = vadd.f32 %v1003, 1.0
    %v1005 = vrcp.pop %v1004
    %v1006 = vmul.f32 %v1004, %v1005
    %v1007 = vsub.f32 1.0, %v1006
    %v1008 = vmul.f32 %v1005, %v1007
    %v1009 = vadd.f32 %v1005, %v1008
    %vm1010 = vweird.f32 %v1004
    %vm1011 = vweird.f32 %v1005
    %vm1012 = vmor %vm1010, %vm1011
    %v1013 = vsel %vm1012, %v1005, %v1009
    %v1014 = vand.u32 2147483647, %v1004
    %vm1015 = vcmp.eq.f32.partialorder %v1014, 8.507059e+37
    %v1016 = vand.u32 %v1004, 2147483648
    %v1017 = vor.u32 1.1754944e-38, %v1016
    %v1018 = vsel %vm1015, %v1017, %v1013
    %v1019 = vmul.f32 1.0, %v1018
    %v1020 = vxor.u32 %v998, 2147483648
    %v1021 = vmul.f32 %v1020, 1.442695
    %v1022 = vpow.pop %v1021
    %v1023 = vadd.f32 %v1022, 1.0
    %v1024 = vrcp.pop %v1023
    %v1025 = vmul.f32 %v1023, %v1024
    %v1026 = vsub.f32 1.0, %v1025
    %v1027 = vmul.f32 %v1024, %v1026
    %v1028 = vadd.f32 %v1024, %v1027
    %vm1029 = vweird.f32 %v1023
    %vm1030 = vweird.f32 %v1024
    %vm1031 = vmor %vm1029, %vm1030
    %v1032 = vsel %vm1031, %v1024, %v1028
    %v1033 = vand.u32 2147483647, %v1023
    %vm1034 = vcmp.eq.f32.partialorder %v1033, 8.507059e+37
    %v1035 = vand.u32 %v1023, 2147483648
    %v1036 = vor.u32 1.1754944e-38, %v1035
    %v1037 = vsel %vm1034, %v1036, %v1032
    %v1038 = vmul.f32 1.0, %v1037
    %v1039 = vtanh.pop %v999
    %v1040 = vxor.u32 %v1000, 2147483648
    %v1041 = vmul.f32 %v1040, 1.442695
    %v1042 = vpow.pop %v1041
    %v1043 = vadd.f32 %v1042, 1.0
    %v1044 = vrcp.pop %v1043
    %v1045 = vmul.f32 %v1043, %v1044
    %v1046 = vsub.f32 1.0, %v1045
    %v1047 = vmul.f32 %v1044, %v1046
    %v1048 = vadd.f32 %v1044, %v1047
    %vm1049 = vweird.f32 %v1043
    %vm1050 = vweird.f32 %v1044
    %vm1051 = vmor %vm1049, %vm1050
    %v1052 = vsel %vm1051, %v1044, %v1048
    %v1053 = vand.u32 2147483647, %v1043
    %vm1054 = vcmp.eq.f32.partialorder %v1053, 8.507059e+37
    %v1055 = vand.u32 %v1043, 2147483648
    %v1056 = vor.u32 1.1754944e-38, %v1055
    %v1057 = vsel %vm1054, %v1056, %v1052
    %v1058 = vmul.f32 1.0, %v1057
    %v1060 = vrot.slane %v899, 7
    %v1062 = vmul.f32 %v1038, %v1060
    %v1063 = vmul.f32 %v1019, %v1039
    %v1064 = vadd.f32 %v1062, %v1063
    %v1065 = vtanh.pop %v1064
    %v1066 = vmul.f32 %v1058, %v1065
    %v1068 = vrot.slane %v1066, 4
    %1070 = vmatpush.msra.mxu0 %v257
    %1071 = vmatpush.msra.mxu0 %v253
    %1072 = vmatpush.msra.mxu0 %v249
    %1073 = vmatpush.msra.mxu0 %v245
    %1074 = vmatpush.msra.mxu0 %v241
    %1075 = vmatpush.msra.mxu0 %v237
    %1076 = vmatpush.msra.mxu0 %v233
    %1077 = vmatpush.msra.mxu0 %v229
    %1078 = vmatpush.msra.mxu0 %v225
    %1079 = vmatpush.msra.mxu0 %v221
    %1080 = vmatpush.msra.mxu0 %v217
    %1081 = vmatpush.msra.mxu0 %v213
    %1082 = vmatpush.msra.mxu0 %v209
    %1083 = vmatpush.msra.mxu0 %v205
    %1084 = vmatpush.msra.mxu0 %v201
    %1085 = vmatpush.msra.mxu0 %v197
    %1086 = vmatmul.f32.gmra.mxu0 %v1068
    %v1087 = vpop.f32.mrf.mxu0
    %v1088 = vadd.f32 0.0, %v1087
    %1089 = vdwg.mxu0
    %1090 = vmatpush.msra.mxu0 %v258
    %1091 = vmatpush.msra.mxu0 %v254
    %1092 = vmatpush.msra.mxu0 %v250
    %1093 = vmatpush.msra.mxu0 %v246
    %1094 = vmatpush.msra.mxu0 %v242
    %1095 = vmatpush.msra.mxu0 %v238
    %1096 = vmatpush.msra.mxu0 %v234
    %1097 = vmatpush.msra.mxu0 %v230
    %1098 = vmatpush.msra.mxu0 %v226
    %1099 = vmatpush.msra.mxu0 %v222
    %1100 = vmatpush.msra.mxu0 %v218
    %1101 = vmatpush.msra.mxu0 %v214
    %1102 = vmatpush.msra.mxu0 %v210
    %1103 = vmatpush.msra.mxu0 %v206
    %1104 = vmatpush.msra.mxu0 %v202
    %1105 = vmatpush.msra.mxu0 %v198
    %1106 = vmatmul.f32.gmra.mxu0 %v1068
    %v1107 = vpop.f32.mrf.mxu0
    %v1108 = vadd.f32 0.0, %v1107
    %1109 = vdwg.mxu0
    %1110 = vmatpush.msra.mxu0 %v259
    %1111 = vmatpush.msra.mxu0 %v255
    %1112 = vmatpush.msra.mxu0 %v251
    %1113 = vmatpush.msra.mxu0 %v247
    %1114 = vmatpush.msra.mxu0 %v243
    %1115 = vmatpush.msra.mxu0 %v239
    %1116 = vmatpush.msra.mxu0 %v235
    %1117 = vmatpush.msra.mxu0 %v231
    %1118 = vmatpush.msra.mxu0 %v227
    %1119 = vmatpush.msra.mxu0 %v223
    %1120 = vmatpush.msra.mxu0 %v219
    %1121 = vmatpush.msra.mxu0 %v215
    %1122 = vmatpush.msra.mxu0 %v211
    %1123 = vmatpush.msra.mxu0 %v207
    %1124 = vmatpush.msra.mxu0 %v203
    %1125 = vmatpush.msra.mxu0 %v199
    %1126 = vmatmul.f32.gmra.mxu0 %v1068
    %v1127 = vpop.f32.mrf.mxu0
    %v1128 = vadd.f32 0.0, %v1127
    %1129 = vdwg.mxu0
    %1130 = vmatpush.msra.mxu0 %v260
    %1131 = vmatpush.msra.mxu0 %v256
    %1132 = vmatpush.msra.mxu0 %v252
    %1133 = vmatpush.msra.mxu0 %v248
    %1134 = vmatpush.msra.mxu0 %v244
    %1135 = vmatpush.msra.mxu0 %v240
    %1136 = vmatpush.msra.mxu0 %v236
    %1137 = vmatpush.msra.mxu0 %v232
    %1138 = vmatpush.msra.mxu0 %v228
    %1139 = vmatpush.msra.mxu0 %v224
    %1140 = vmatpush.msra.mxu0 %v220
    %1141 = vmatpush.msra.mxu0 %v216
    %1142 = vmatpush.msra.mxu0 %v212
    %1143 = vmatpush.msra.mxu0 %v208
    %1144 = vmatpush.msra.mxu0 %v204
    %1145 = vmatpush.msra.mxu0 %v200
    %1146 = vmatmul.f32.gmra.mxu0 %v1068
    %v1147 = vpop.f32.mrf.mxu0
    %v1148 = vadd.f32 0.0, %v1147
    %1149 = vdwg.mxu0
    %v1154 = vrot.slane %v1088, 3
    %v1155 = vrot.slane %v1108, 3
    %v1156 = vrot.slane %v1128, 3
    %v1157 = vrot.slane %v1148, 3
    %v1162 = vadd.f32 %v135, %v1154
    %v1163 = vadd.f32 %v155, %v1155
    %v1164 = vadd.f32 %v175, %v1156
    %v1165 = vadd.f32 %v195, %v1157
    %v1166 = vxor.u32 %v1162, 2147483648
    %v1167 = vmul.f32 %v1166, 1.442695
    %v1168 = vpow.pop %v1167
    %v1169 = vadd.f32 %v1168, 1.0
    %v1170 = vrcp.pop %v1169
    %v1171 = vmul.f32 %v1169, %v1170
    %v1172 = vsub.f32 1.0, %v1171
    %v1173 = vmul.f32 %v1170, %v1172
    %v1174 = vadd.f32 %v1170, %v1173
    %vm1175 = vweird.f32 %v1169
    %vm1176 = vweird.f32 %v1170
    %vm1177 = vmor %vm1175, %vm1176
    %v1178 = vsel %vm1177, %v1170, %v1174
    %v1179 = vand.u32 2147483647, %v1169
    %vm1180 = vcmp.eq.f32.partialorder %v1179, 8.507059e+37
    %v1181 = vand.u32 %v1169, 2147483648
    %v1182 = vor.u32 1.1754944e-38, %v1181
    %v1183 = vsel %vm1180, %v1182, %v1178
    %v1184 = vmul.f32 1.0, %v1183
    %v1185 = vxor.u32 %v1163, 2147483648
    %v1186 = vmul.f32 %v1185, 1.442695
    %v1187 = vpow.pop %v1186
    %v1188 = vadd.f32 %v1187, 1.0
    %v1189 = vrcp.pop %v1188
    %v1190 = vmul.f32 %v1188, %v1189
    %v1191 = vsub.f32 1.0, %v1190
    %v1192 = vmul.f32 %v1189, %v1191
    %v1193 = vadd.f32 %v1189, %v1192
    %vm1194 = vweird.f32 %v1188
    %vm1195 = vweird.f32 %v1189
    %vm1196 = vmor %vm1194, %vm1195
    %v1197 = vsel %vm1196, %v1189, %v1193
    %v1198 = vand.u32 2147483647, %v1188
    %vm1199 = vcmp.eq.f32.partialorder %v1198, 8.507059e+37
    %v1200 = vand.u32 %v1188, 2147483648
    %v1201 = vor.u32 1.1754944e-38, %v1200
    %v1202 = vsel %vm1199, %v1201, %v1197
    %v1203 = vmul.f32 1.0, %v1202
    %v1204 = vtanh.pop %v1164
    %v1205 = vxor.u32 %v1165, 2147483648
    %v1206 = vmul.f32 %v1205, 1.442695
    %v1207 = vpow.pop %v1206
    %v1208 = vadd.f32 %v1207, 1.0
    %v1209 = vrcp.pop %v1208
    %v1210 = vmul.f32 %v1208, %v1209
    %v1211 = vsub.f32 1.0, %v1210
    %v1212 = vmul.f32 %v1209, %v1211
    %v1213 = vadd.f32 %v1209, %v1212
    %vm1214 = vweird.f32 %v1208
    %vm1215 = vweird.f32 %v1209
    %vm1216 = vmor %vm1214, %vm1215
    %v1217 = vsel %vm1216, %v1209, %v1213
    %v1218 = vand.u32 2147483647, %v1208
    %vm1219 = vcmp.eq.f32.partialorder %v1218, 8.507059e+37
    %v1220 = vand.u32 %v1208, 2147483648
    %v1221 = vor.u32 1.1754944e-38, %v1220
    %v1222 = vsel %vm1219, %v1221, %v1217
    %v1223 = vmul.f32 1.0, %v1222
    %v1225 = vrot.slane %v1064, 7
    %v1227 = vmul.f32 %v1203, %v1225
    %v1228 = vmul.f32 %v1184, %v1204
    %v1229 = vadd.f32 %v1227, %v1228
    %v1230 = vtanh.pop %v1229
    %v1231 = vmul.f32 %v1223, %v1230
    %v1233 = vrot.slane %v1231, 5
    %1235 = vmatpush.msra.mxu0 %v257
    %1236 = vmatpush.msra.mxu0 %v253
    %1237 = vmatpush.msra.mxu0 %v249
    %1238 = vmatpush.msra.mxu0 %v245
    %1239 = vmatpush.msra.mxu0 %v241
    %1240 = vmatpush.msra.mxu0 %v237
    %1241 = vmatpush.msra.mxu0 %v233
    %1242 = vmatpush.msra.mxu0 %v229
    %1243 = vmatpush.msra.mxu0 %v225
    %1244 = vmatpush.msra.mxu0 %v221
    %1245 = vmatpush.msra.mxu0 %v217
    %1246 = vmatpush.msra.mxu0 %v213
    %1247 = vmatpush.msra.mxu0 %v209
    %1248 = vmatpush.msra.mxu0 %v205
    %1249 = vmatpush.msra.mxu0 %v201
    %1250 = vmatpush.msra.mxu0 %v197
    %1251 = vmatmul.f32.gmra.mxu0 %v1233
    %v1252 = vpop.f32.mrf.mxu0
    %v1253 = vadd.f32 0.0, %v1252
    %1254 = vdwg.mxu0
    %1255 = vmatpush.msra.mxu0 %v258
    %1256 = vmatpush.msra.mxu0 %v254
    %1257 = vmatpush.msra.mxu0 %v250
    %1258 = vmatpush.msra.mxu0 %v246
    %1259 = vmatpush.msra.mxu0 %v242
    %1260 = vmatpush.msra.mxu0 %v238
    %1261 = vmatpush.msra.mxu0 %v234
    %1262 = vmatpush.msra.mxu0 %v230
    %1263 = vmatpush.msra.mxu0 %v226
    %1264 = vmatpush.msra.mxu0 %v222
    %1265 = vmatpush.msra.mxu0 %v218
    %1266 = vmatpush.msra.mxu0 %v214
    %1267 = vmatpush.msra.mxu0 %v210
    %1268 = vmatpush.msra.mxu0 %v206
    %1269 = vmatpush.msra.mxu0 %v202
    %1270 = vmatpush.msra.mxu0 %v198
    %1271 = vmatmul.f32.gmra.mxu0 %v1233
    %v1272 = vpop.f32.mrf.mxu0
    %v1273 = vadd.f32 0.0, %v1272
    %1274 = vdwg.mxu0
    %1275 = vmatpush.msra.mxu0 %v259
    %1276 = vmatpush.msra.mxu0 %v255
    %1277 = vmatpush.msra.mxu0 %v251
    %1278 = vmatpush.msra.mxu0 %v247
    %1279 = vmatpush.msra.mxu0 %v243
    %1280 = vmatpush.msra.mxu0 %v239
    %1281 = vmatpush.msra.mxu0 %v235
    %1282 = vmatpush.msra.mxu0 %v231
    %1283 = vmatpush.msra.mxu0 %v227
    %1284 = vmatpush.msra.mxu0 %v223
    %1285 = vmatpush.msra.mxu0 %v219
    %1286 = vmatpush.msra.mxu0 %v215
    %1287 = vmatpush.msra.mxu0 %v211
    %1288 = vmatpush.msra.mxu0 %v207
    %1289 = vmatpush.msra.mxu0 %v203
    %1290 = vmatpush.msra.mxu0 %v199
    %1291 = vmatmul.f32.gmra.mxu0 %v1233
    %v1292 = vpop.f32.mrf.mxu0
    %v1293 = vadd.f32 0.0, %v1292
    %1294 = vdwg.mxu0
    %1295 = vmatpush.msra.mxu0 %v260
    %1296 = vmatpush.msra.mxu0 %v256
    %1297 = vmatpush.msra.mxu0 %v252
    %1298 = vmatpush.msra.mxu0 %v248
    %1299 = vmatpush.msra.mxu0 %v244
    %1300 = vmatpush.msra.mxu0 %v240
    %1301 = vmatpush.msra.mxu0 %v236
    %1302 = vmatpush.msra.mxu0 %v232
    %1303 = vmatpush.msra.mxu0 %v228
    %1304 = vmatpush.msra.mxu0 %v224
    %1305 = vmatpush.msra.mxu0 %v220
    %1306 = vmatpush.msra.mxu0 %v216
    %1307 = vmatpush.msra.mxu0 %v212
    %1308 = vmatpush.msra.mxu0 %v208
    %1309 = vmatpush.msra.mxu0 %v204
    %1310 = vmatpush.msra.mxu0 %v200
    %1311 = vmatmul.f32.gmra.mxu0 %v1233
    %v1312 = vpop.f32.mrf.mxu0
    %v1313 = vadd.f32 0.0, %v1312
    %1314 = vdwg.mxu0
    %v1319 = vrot.slane %v1253, 2
    %v1320 = vrot.slane %v1273, 2
    %v1321 = vrot.slane %v1293, 2
    %v1322 = vrot.slane %v1313, 2
    %v1327 = vadd.f32 %v135, %v1319
    %v1328 = vadd.f32 %v155, %v1320
    %v1329 = vadd.f32 %v175, %v1321
    %v1330 = vadd.f32 %v195, %v1322
    %v1331 = vxor.u32 %v1327, 2147483648
    %v1332 = vmul.f32 %v1331, 1.442695
    %v1333 = vpow.pop %v1332
    %v1334 = vadd.f32 %v1333, 1.0
    %v1335 = vrcp.pop %v1334
    %v1336 = vmul.f32 %v1334, %v1335
    %v1337 = vsub.f32 1.0, %v1336
    %v1338 = vmul.f32 %v1335, %v1337
    %v1339 = vadd.f32 %v1335, %v1338
    %vm1340 = vweird.f32 %v1334
    %vm1341 = vweird.f32 %v1335
    %vm1342 = vmor %vm1340, %vm1341
    %v1343 = vsel %vm1342, %v1335, %v1339
    %v1344 = vand.u32 2147483647, %v1334
    %vm1345 = vcmp.eq.f32.partialorder %v1344, 8.507059e+37
    %v1346 = vand.u32 %v1334, 2147483648
    %v1347 = vor.u32 1.1754944e-38, %v1346
    %v1348 = vsel %vm1345, %v1347, %v1343
    %v1349 = vmul.f32 1.0, %v1348
    %v1350 = vxor.u32 %v1328, 2147483648
    %v1351 = vmul.f32 %v1350, 1.442695
    %v1352 = vpow.pop %v1351
    %v1353 = vadd.f32 %v1352, 1.0
    %v1354 = vrcp.pop %v1353
    %v1355 = vmul.f32 %v1353, %v1354
    %v1356 = vsub.f32 1.0, %v1355
    %v1357 = vmul.f32 %v1354, %v1356
    %v1358 = vadd.f32 %v1354, %v1357
    %vm1359 = vweird.f32 %v1353
    %vm1360 = vweird.f32 %v1354
    %vm1361 = vmor %vm1359, %vm1360
    %v1362 = vsel %vm1361, %v1354, %v1358
    %v1363 = vand.u32 2147483647, %v1353
    %vm1364 = vcmp.eq.f32.partialorder %v1363, 8.507059e+37
    %v1365 = vand.u32 %v1353, 2147483648
    %v1366 = vor.u32 1.1754944e-38, %v1365
    %v1367 = vsel %vm1364, %v1366, %v1362
    %v1368 = vmul.f32 1.0, %v1367
    %v1369 = vtanh.pop %v1329
    %v1370 = vxor.u32 %v1330, 2147483648
    %v1371 = vmul.f32 %v1370, 1.442695
    %v1372 = vpow.pop %v1371
    %v1373 = vadd.f32 %v1372, 1.0
    %v1374 = vrcp.pop %v1373
    %v1375 = vmul.f32 %v1373, %v1374
    %v1376 = vsub.f32 1.0, %v1375
    %v1377 = vmul.f32 %v1374, %v1376
    %v1378 = vadd.f32 %v1374, %v1377
    %vm1379 = vweird.f32 %v1373
    %vm1380 = vweird.f32 %v1374
    %vm1381 = vmor %vm1379, %vm1380
    %v1382 = vsel %vm1381, %v1374, %v1378
    %v1383 = vand.u32 2147483647, %v1373
    %vm1384 = vcmp.eq.f32.partialorder %v1383, 8.507059e+37
    %v1385 = vand.u32 %v1373, 2147483648
    %v1386 = vor.u32 1.1754944e-38, %v1385
    %v1387 = vsel %vm1384, %v1386, %v1382
    %v1388 = vmul.f32 1.0, %v1387
    %v1390 = vrot.slane %v1229, 7
    %v1392 = vmul.f32 %v1368, %v1390
    %v1393 = vmul.f32 %v1349, %v1369
    %v1394 = vadd.f32 %v1392, %v1393
    %v1395 = vtanh.pop %v1394
    %v1396 = vmul.f32 %v1388, %v1395
    %v1398 = vrot.slane %v1396, 6
    %1400 = vmatpush.msra.mxu0 %v257
    %1401 = vmatpush.msra.mxu0 %v253
    %1402 = vmatpush.msra.mxu0 %v249
    %1403 = vmatpush.msra.mxu0 %v245
    %1404 = vmatpush.msra.mxu0 %v241
    %1405 = vmatpush.msra.mxu0 %v237
    %1406 = vmatpush.msra.mxu0 %v233
    %1407 = vmatpush.msra.mxu0 %v229
    %1408 = vmatpush.msra.mxu0 %v225
    %1409 = vmatpush.msra.mxu0 %v221
    %1410 = vmatpush.msra.mxu0 %v217
    %1411 = vmatpush.msra.mxu0 %v213
    %1412 = vmatpush.msra.mxu0 %v209
    %1413 = vmatpush.msra.mxu0 %v205
    %1414 = vmatpush.msra.mxu0 %v201
    %1415 = vmatpush.msra.mxu0 %v197
    %1416 = vmatmul.f32.gmra.mxu0 %v1398
    %v1417 = vpop.f32.mrf.mxu0
    %v1418 = vadd.f32 0.0, %v1417
    %1419 = vdwg.mxu0
    %1420 = vmatpush.msra.mxu0 %v258
    %1421 = vmatpush.msra.mxu0 %v254
    %1422 = vmatpush.msra.mxu0 %v250
    %1423 = vmatpush.msra.mxu0 %v246
    %1424 = vmatpush.msra.mxu0 %v242
    %1425 = vmatpush.msra.mxu0 %v238
    %1426 = vmatpush.msra.mxu0 %v234
    %1427 = vmatpush.msra.mxu0 %v230
    %1428 = vmatpush.msra.mxu0 %v226
    %1429 = vmatpush.msra.mxu0 %v222
    %1430 = vmatpush.msra.mxu0 %v218
    %1431 = vmatpush.msra.mxu0 %v214
    %1432 = vmatpush.msra.mxu0 %v210
    %1433 = vmatpush.msra.mxu0 %v206
    %1434 = vmatpush.msra.mxu0 %v202
    %1435 = vmatpush.msra.mxu0 %v198
    %1436 = vmatmul.f32.gmra.mxu0 %v1398
    %v1437 = vpop.f32.mrf.mxu0
    %v1438 = vadd.f32 0.0, %v1437
    %1439 = vdwg.mxu0
    %1440 = vmatpush.msra.mxu0 %v259
    %1441 = vmatpush.msra.mxu0 %v255
    %1442 = vmatpush.msra.mxu0 %v251
    %1443 = vmatpush.msra.mxu0 %v247
    %1444 = vmatpush.msra.mxu0 %v243
    %1445 = vmatpush.msra.mxu0 %v239
    %1446 = vmatpush.msra.mxu0 %v235
    %1447 = vmatpush.msra.mxu0 %v231
    %1448 = vmatpush.msra.mxu0 %v227
    %1449 = vmatpush.msra.mxu0 %v223
    %1450 = vmatpush.msra.mxu0 %v219
    %1451 = vmatpush.msra.mxu0 %v215
    %1452 = vmatpush.msra.mxu0 %v211
    %1453 = vmatpush.msra.mxu0 %v207
    %1454 = vmatpush.msra.mxu0 %v203
    %1455 = vmatpush.msra.mxu0 %v199
    %1456 = vmatmul.f32.gmra.mxu0 %v1398
    %v1457 = vpop.f32.mrf.mxu0
    %v1458 = vadd.f32 0.0, %v1457
    %1459 = vdwg.mxu0
    %1460 = vmatpush.msra.mxu0 %v260
    %1461 = vmatpush.msra.mxu0 %v256
    %1462 = vmatpush.msra.mxu0 %v252
    %1463 = vmatpush.msra.mxu0 %v248
    %1464 = vmatpush.msra.mxu0 %v244
    %1465 = vmatpush.msra.mxu0 %v240
    %1466 = vmatpush.msra.mxu0 %v236
    %1467 = vmatpush.msra.mxu0 %v232
    %1468 = vmatpush.msra.mxu0 %v228
    %1469 = vmatpush.msra.mxu0 %v224
    %1470 = vmatpush.msra.mxu0 %v220
    %1471 = vmatpush.msra.mxu0 %v216
    %1472 = vmatpush.msra.mxu0 %v212
    %1473 = vmatpush.msra.mxu0 %v208
    %1474 = vmatpush.msra.mxu0 %v204
    %1475 = vmatpush.msra.mxu0 %v200
    %1476 = vmatmul.f32.gmra.mxu0 %v1398
    %v1477 = vpop.f32.mrf.mxu0
    %v1478 = vadd.f32 0.0, %v1477
    %1479 = vdwg.mxu0
    %v1484 = vrot.slane %v1418, 1
    %v1485 = vrot.slane %v1438, 1
    %v1486 = vrot.slane %v1458, 1
    %v1487 = vrot.slane %v1478, 1
    %v1492 = vadd.f32 %v135, %v1484
    %v1493 = vadd.f32 %v155, %v1485
    %v1494 = vadd.f32 %v175, %v1486
    %v1495 = vadd.f32 %v195, %v1487
    %v1496 = vxor.u32 %v1492, 2147483648
    %v1497 = vmul.f32 %v1496, 1.442695
    %v1498 = vpow.pop %v1497
    %v1499 = vadd.f32 %v1498, 1.0
    %v1500 = vrcp.pop %v1499
    %v1501 = vmul.f32 %v1499, %v1500
    %v1502 = vsub.f32 1.0, %v1501
    %v1503 = vmul.f32 %v1500, %v1502
    %v1504 = vadd.f32 %v1500, %v1503
    %vm1505 = vweird.f32 %v1499
    %vm1506 = vweird.f32 %v1500
    %vm1507 = vmor %vm1505, %vm1506
    %v1508 = vsel %vm1507, %v1500, %v1504
    %v1509 = vand.u32 2147483647, %v1499
    %vm1510 = vcmp.eq.f32.partialorder %v1509, 8.507059e+37
    %v1511 = vand.u32 %v1499, 2147483648
    %v1512 = vor.u32 1.1754944e-38, %v1511
    %v1513 = vsel %vm1510, %v1512, %v1508
    %v1514 = vmul.f32 1.0, %v1513
    %v1515 = vxor.u32 %v1493, 2147483648
    %v1516 = vmul.f32 %v1515, 1.442695
    %v1517 = vpow.pop %v1516
    %v1518 = vadd.f32 %v1517, 1.0
    %v1519 = vrcp.pop %v1518
    %v1520 = vmul.f32 %v1518, %v1519
    %v1521 = vsub.f32 1.0, %v1520
    %v1522 = vmul.f32 %v1519, %v1521
    %v1523 = vadd.f32 %v1519, %v1522
    %vm1524 = vweird.f32 %v1518
    %vm1525 = vweird.f32 %v1519
    %vm1526 = vmor %vm1524, %vm1525
    %v1527 = vsel %vm1526, %v1519, %v1523
    %v1528 = vand.u32 2147483647, %v1518
    %vm1529 = vcmp.eq.f32.partialorder %v1528, 8.507059e+37
    %v1530 = vand.u32 %v1518, 2147483648
    %v1531 = vor.u32 1.1754944e-38, %v1530
    %v1532 = vsel %vm1529, %v1531, %v1527
    %v1533 = vmul.f32 1.0, %v1532
    %v1534 = vtanh.pop %v1494
    %v1535 = vxor.u32 %v1495, 2147483648
    %v1536 = vmul.f32 %v1535, 1.442695
    %v1537 = vpow.pop %v1536
    %v1538 = vadd.f32 %v1537, 1.0
    %v1539 = vrcp.pop %v1538
    %v1540 = vmul.f32 %v1538, %v1539
    %v1541 = vsub.f32 1.0, %v1540
    %v1542 = vmul.f32 %v1539, %v1541
    %v1543 = vadd.f32 %v1539, %v1542
    %vm1544 = vweird.f32 %v1538
    %vm1545 = vweird.f32 %v1539
    %vm1546 = vmor %vm1544, %vm1545
    %v1547 = vsel %vm1546, %v1539, %v1543
    %v1548 = vand.u32 2147483647, %v1538
    %vm1549 = vcmp.eq.f32.partialorder %v1548, 8.507059e+37
    %v1550 = vand.u32 %v1538, 2147483648
    %v1551 = vor.u32 1.1754944e-38, %v1550
    %v1552 = vsel %vm1549, %v1551, %v1547
    %v1553 = vmul.f32 1.0, %v1552
    %v1555 = vrot.slane %v1394, 7
    %v1557 = vmul.f32 %v1533, %v1555
    %v1558 = vmul.f32 %v1514, %v1534
    %v1559 = vadd.f32 %v1557, %v1558
    %v1560 = vtanh.pop %v1559
    %v1561 = vmul.f32 %v1553, %v1560
    %1562 = vst [vmem:[#allocation9 - $0x7] sm:$0x80] %v1561
    %1563 = vst [vmem:[#allocation10 - $0x7] sm:$0x80] %v1559
    %vm1564 = vcmask 1040384
    %v1565 = vsel %vm1564, %v409, %v571
    %vm1566 = vcmask 1041408
    %v1567 = vsel %vm1566, %v1565, %v736
    %v1568 = vsel %vm104, %v1567, %v901
    %vm1569 = vcmask 1043456
    %v1570 = vsel %vm1569, %v1568, %v1066
    %vm1571 = vcmask 1044480
    %v1572 = vsel %vm1571, %v1570, %v1231
    %vm1573 = vcmask 1045504
    %v1574 = vsel %vm1573, %v1572, %v1396
    %vm1575 = vcmask 1046528
    %v1576 = vsel %vm1575, %v1574, %v1561
    %v1577 = vld [vmem:[%s4] sm:$0x1]
    %v1579 = vperm.slane %v1577, 0
    %v1581 = vmul.f32 %v1576, %v1579
    %1582 = vadd.xlane.f32.xlu0 %v1581
    %v1583 = vpop.xlane.xlu0 %1582
    %v1584 = vld [vmem:[#allocation2] sm:$0x1]
    %v1586 = vperm.slane %v1584, 0
    %v1588 = vadd.f32 %v1583, %v1586
    %vm1589 = vcmask 7168
    %1590 = vst.msk [vmem:[%s8] sm:$0xff] %vm1589, %v1588
    // Predicated region
    $region46: #{tpu_custom_call.1} parent=1 // pred_check
      _
    $region47: #{tpu_custom_call.1} parent=1 // pred_check_branch
      %1592 = sbr.rel (0) target = $region49
    $region48: #{tpu_custom_call.1} parent=1 // pred_region
      _
    $region49: #{tpu_custom_call.1} parent=1 // pred_fallthru
      _
    // Predicated region
    $region50: #{tpu_custom_call.1} parent=1 // pred_check
      _
    $region51: #{tpu_custom_call.1} parent=1 // pred_check_branch
      %1594 = sbr.rel (0) target = $region53
    $region52: #{tpu_custom_call.1} parent=1 // pred_region
      %1596 = vsyncadd [#allocation5], 0
      %s1598 = sshll.u32 [#allocation9], 4
      %s1599 = int_to_ptr.vmem [resolvable:$true] %s1598
      %s1600 = sshll.u32 %s9, 4
      %s1601 = int_to_ptr.hbm [resolvable:$true] %s1600
      %1603 = dma.vmem_to_hbm [thread:$0]  %s1599, 16, %s1601, [#allocation5]
    $region53: #{tpu_custom_call.1} parent=1 // pred_fallthru
      _
    // Predicated region
    $region54: #{tpu_custom_call.1} parent=1 // pred_check
      _
    $region55: #{tpu_custom_call.1} parent=1 // pred_check_branch
      %1605 = sbr.rel (0) target = $region57
    $region56: #{tpu_custom_call.1} parent=1 // pred_region
      %1607 = vsyncadd [#allocation11], 0
      %s1609 = sshll.u32 [#allocation10], 4
      %s1610 = int_to_ptr.vmem [resolvable:$true] %s1609
      %s1611 = sshll.u32 %s10, 4
      %s1612 = int_to_ptr.hbm [resolvable:$true] %s1611
      %1614 = dma.vmem_to_hbm [thread:$0]  %s1610, 16, %s1612, [#allocation11]
    $region57: #{tpu_custom_call.1} parent=1 // pred_fallthru
      _
    // Predicated region
    $region58: #{tpu_custom_call.1} parent=1 // pred_check
      _
    $region59: #{tpu_custom_call.1} parent=1 // pred_check_branch
      %1616 = sbr.rel (0) target = $region61
    $region60: #{tpu_custom_call.1} parent=1 // pred_region
      _
    $region61: #{tpu_custom_call.1} parent=1 // pred_fallthru
      _
    // Predicated region
    $region62: #{tpu_custom_call.1} parent=1 // pred_check
      _
    $region63: #{tpu_custom_call.1} parent=1 // pred_check_branch
      %1618 = sbr.rel (0) target = $region65
    $region64: #{tpu_custom_call.1} parent=1 // pred_region
      %1620 = dma.done [#allocation5], 16
    $region65: #{tpu_custom_call.1} parent=1 // pred_fallthru
      _
    // Predicated region
    $region66: #{tpu_custom_call.1} parent=1 // pred_check
      _
    $region67: #{tpu_custom_call.1} parent=1 // pred_check_branch
      %1622 = sbr.rel (0) target = $region69
    $region68: #{tpu_custom_call.1} parent=1 // pred_region
      %1624 = dma.done [#allocation11], 16
    $region69: #{tpu_custom_call.1} parent=1 // pred_fallthru
      _
    %1625 = vsyncpa [#allocation4], 1
    %1626 = vsyncpa [#allocation7], 1
    %1627 = vsyncpa [#allocation5], 1
    %1628 = vsyncpa [#allocation11], 1

</llo_original>
